<compile_context>
chip_gen: v5e
topology: v5e:2x2
jax: 0.10.0
libtpu: 0.0.40
codegen_flags: <defaults>
</compile_context>

<pallas_src>
import jax
import jax.numpy as jnp
from jax import lax
from jax.experimental import pallas as pl
from jax.experimental.pallas import tpu as pltpu

# ---------------- synthetic hyper-params (the `data` config) ----------------
BATCH = 2
SEQ = 8
VOCAB = 50
WORD_EMB_DIM = 32          # data.word_emb_dim
GLOBAL_HIDDEN = 32         # data.global_hidden_dim
HIDDEN_DIM = 64            # data.HP_hidden_dim (bilstm -> lstm_hidden = 32)
LSTM_HIDDEN = HIDDEN_DIM // 2
NUM_LABELS = 16            # data.label_alphabet_size
KERNEL_SIZE = 3            # data.global_kernel_size
MEM_ALPHA = 0.5            # data.mem_bank_alpha
INPUT_SIZE = WORD_EMB_DIM + GLOBAL_HIDDEN   # use_char = False

NLP = 128                  # padded tag lane width (lane-dense output store)

# ---------------- packed parameter slab layout (rows, 256 lanes wide) -------
# All weight block starts are multiples of 8 (sublane aligned).
R_WX = 0                                     # (INPUT_SIZE, 8H) fused input weights
R_WH = R_WX + INPUT_SIZE                     # 64:  (2H, 8H) block-diag recurrent
R_BX = R_WH + HIDDEN_DIM                     # 128: (1, 8H) fused input bias
R_LE = 136                                   # (Dw, L) normalized label emb (transposed)
R_WSENT = R_LE + WORD_EMB_DIM                # 168: (Dw, G)
R_WCONV = R_WSENT + WORD_EMB_DIM             # 200: (K*L, L) conv weights, k-major
R_WMEM = R_WCONV + KERNEL_SIZE * NUM_LABELS  # 248: (Dw, 2H)
R_WH2T = R_WMEM + WORD_EMB_DIM               # 280: (2H, 128) hidden2tag * (1-alpha)
R_WM2T = R_WH2T + HIDDEN_DIM                 # 344: (2H, 128) mem2tag * alpha
R_BSENT = R_WM2T + HIDDEN_DIM                # 408: (1, G)
R_BCONV = R_BSENT + 1                        # 409: (1, L)
R_BMEM = R_BCONV + 1                         # 410: (1, 2H)
R_BBLEND = R_BMEM + 1                        # 411: (1, 128) merged blended tag bias
SLAB_ROWS = 416


# ------------------------------------------------------------- fused kernel
def _fused_kernel(we_ref, mask_ref, ps_ref, out_ref, lab_pad_ref, feat_ref):
    """Fused WordSequence.forward hot path, whole (tiny) batch, time-major rows."""
    f32 = jnp.float32
    B, S, L, G, H, Dw = BATCH, SEQ, NUM_LABELS, GLOBAL_HIDDEN, LSTM_HIDDEN, WORD_EMB_DIM
    H2, H6, H8 = 2 * H, 6 * H, 8 * H
    SB = S * B

    we = we_ref[...]                                    # (S*B, Dw) word embeddings
    mask = mask_ref[...]                                # (S*B, 1)  float mask

    # ---- static views into the packed parameter slab (zero-cost slices) ----
    wx_w = ps_ref[R_WX:R_WX + Dw, :]                    # (Dw, 8H) word part of Wx
    wx_s = ps_ref[R_WX + Dw:R_WX + Dw + G, :]           # (G, 8H)  sentence-rep part
    wh = ps_ref[R_WH:R_WH + H2, :]                      # (2H, 8H) block-diag recurrent
    bx = ps_ref[R_BX:R_BX + 1, :]                       # (1, 8H)
    le_t = ps_ref[R_LE:R_LE + Dw, :L]                   # (Dw, L)  normalized label emb^T
    w_sent = ps_ref[R_WSENT:R_WSENT + Dw, :G]           # (Dw, G)
    w_mem = ps_ref[R_WMEM:R_WMEM + Dw, :H2]             # (Dw, 2H)
    w_h2t = ps_ref[R_WH2T:R_WH2T + H2, :NLP]            # (2H, 128) pre-scaled (1-alpha)
    w_m2t = ps_ref[R_WM2T:R_WM2T + H2, :NLP]            # (2H, 128) pre-scaled alpha
    b_sent = ps_ref[R_BSENT:R_BSENT + 1, :G]            # (1, G)
    conv_b = ps_ref[R_BCONV:R_BCONV + 1, :L]            # (1, L)
    b_mem = ps_ref[R_BMEM:R_BMEM + 1, :H2]              # (1, 2H)
    b_blend = ps_ref[R_BBLEND:R_BBLEND + 1, :NLP]       # (1, 128) merged tag bias

    # ---- WordRep stand-in tail: cosine similarity word-emb vs label-emb ----
    # TODO(synk): WordRep / char features are not given in the module source.
    nrm = jnp.sqrt(jnp.sum(we * we, axis=1, keepdims=True))
    lab = jnp.dot(we / (nrm + 1e-8), le_t, preferred_element_type=f32)   # (S*B, L)

    # ---- SentenceRep stand-in: token-wise tanh projection ----
    # TODO(synk): SentenceRep internals not specified; using tanh(W x + b).
    sh = jnp.tanh(jnp.dot(we, w_sent, preferred_element_type=f32) + b_sent)  # (S*B, G)

    # ---- label2cnn: pad once into scratch, three shifted whole-batch matmuls ----
    lab_pad_ref[0:B, :] = jnp.zeros((B, L), f32)                   # t = -1 rows
    lab_pad_ref[B + SB:B + SB + B, :] = jnp.zeros((B, L), f32)     # t = S rows
    lab_pad_ref[B:B + SB, :] = lab
    prev = lab_pad_ref[0:SB, :]                                    # x[t-1]
    nxt = lab_pad_ref[2 * B:2 * B + SB, :]                         # x[t+1]
    conv = (jnp.dot(prev, ps_ref[R_WCONV:R_WCONV + L, :L], preferred_element_type=f32)
            + jnp.dot(lab, ps_ref[R_WCONV + L:R_WCONV + 2 * L, :L],
                      preferred_element_type=f32)
            + jnp.dot(nxt, ps_ref[R_WCONV + 2 * L:R_WCONV + 3 * L, :L],
                      preferred_element_type=f32)
            + conv_b)                                              # (S*B, L)
    fmax = jnp.max(jnp.maximum(conv, 0.0), axis=1, keepdims=True)  # (S*B, 1)

    # ---- partial_softmax over time + weighted sentence hidden, both batches ----
    valid = mask > 0.0
    gmax = jnp.max(jnp.where(valid, fmax, -1e30), axis=0, keepdims=True)  # stabilizer
    e = jnp.where(valid, jnp.exp(fmax - gmax), 0.0)                # (S*B, 1)
    col = lax.broadcasted_iota(jnp.int32, (B, SB), 1)
    row = lax.broadcasted_iota(jnp.int32, (B, SB), 0)
    sel = (col % B == row).astype(f32)                             # (B, S*B) batch selector
    y = jnp.dot(sel, jnp.concatenate([e * sh, e], axis=1),
                preferred_element_type=f32)                        # (B, G+1)
    num, den = y[:, :G], y[:, G:G + 1]
    rep = num / jnp.where(den > 0.0, den, 1.0)                     # (B, G) sentence rep

    # ---- bidirectional LSTM: hoisted x-projection + per-step (B,2H)@(2H,8H) ----
    xproj = jnp.dot(we, wx_w, preferred_element_type=f32) + bx     # (S*B, 8H)
    rep_proj = jnp.dot(rep, wx_s, preferred_element_type=f32)      # (B, 8H)

    lane2 = lax.broadcasted_iota(jnp.int32, (B, H2), 1)
    is_fwd2 = lane2 < H                                            # (B, 2H)
    lane8 = lax.broadcasted_iota(jnp.int32, (B, H8), 1)
    is_fwd8 = (lane8 % H2) < H                                     # (B, 8H)

    # Carry layout: (B, 2H) = [fwd | bwd].  Gate-major 8H column layout:
    # [i_f,i_b, f_f,f_b, o_f,o_b, g_f,g_b] (sigmoid gates first, tanh gate last).
    h = jnp.zeros((B, H2), f32)
    c = jnp.zeros((B, H2), f32)
    for i in range(S):                       # S = 8, fully unrolled; carry is only h, c
        tf, tb = i, S - 1 - i
        xf = xproj[tf * B:(tf + 1) * B, :]                         # (B, 8H) one slice
        xb = xproj[tb * B:(tb + 1) * B, :]
        pre = (jnp.where(is_fwd8, xf, xb) + rep_proj
               + jnp.dot(h, wh, preferred_element_type=f32))       # one MXU push / step
        sig = jax.nn.sigmoid(pre[:, :H6])                          # i, f, o gate pairs
        g_all = jnp.tanh(pre[:, H6:])                              # g gate pair
        c_new = sig[:, H2:2 * H2] * c + sig[:, :H2] * g_all
        h_new = sig[:, 2 * H2:3 * H2] * jnp.tanh(c_new)
        m_comb = jnp.where(is_fwd2, mask[tf * B:(tf + 1) * B, :],
                           mask[tb * B:(tb + 1) * B, :])           # (B, 2H)
        h_out = h_new * m_comb                                     # pad positions -> 0
        h = h_out + (1.0 - m_comb) * h                             # freeze state on pad
        c = c_new * m_comb + (1.0 - m_comb) * c
        feat_ref[tf * B:(tf + 1) * B, :H] = h_out[:, :H]           # stream to VMEM scratch
        feat_ref[tb * B:(tb + 1) * B, H:] = h_out[:, H:]

    # ---- hidden2tag + memory-bank doc path (weights pre-blended), lane-dense store ----
    # TODO(synk): MemoryBank internals (and its stateful update) are not given in the
    # module source; doc hidden is a tanh projection of word embeddings on valid tokens.
    feat = feat_ref[...]                                           # (S*B, 2H)
    doc_h = jnp.tanh(jnp.dot(we, w_mem, preferred_element_type=f32) + b_mem) * mask
    out_ref[...] = (jnp.dot(feat, w_h2t, preferred_element_type=f32)
                    + jnp.dot(doc_h, w_m2t, preferred_element_type=f32)
                    + b_blend).astype(out_ref.dtype)


def fused_word_sequence(we_tm, mask_tm, pslab):
    SB = we_tm.shape[0]

    def spec(shape):
        return pl.BlockSpec(shape, lambda i: (0,) * len(shape))

    return pl.pallas_call(
        _fused_kernel,
        out_shape=jax.ShapeDtypeStruct((SB, NLP), jnp.float32),
        grid=(1,),
        in_specs=[spec(we_tm.shape), spec(mask_tm.shape), spec(pslab.shape)],
        out_specs=spec((SB, NLP)),
        scratch_shapes=[
            pltpu.VMEM(((SEQ + 2) * BATCH, NUM_LABELS), jnp.float32),  # padded label sims
            pltpu.VMEM((SB, HIDDEN_DIM), jnp.float32),                 # LSTM features
        ],
        compiler_params=pltpu.CompilerParams(
            dimension_semantics=("arbitrary",)),
    )(we_tm, mask_tm, pslab)


# ----------------------------------------------------------------- glue code
def init_params(key):
    ks = jax.random.split(key, 16)

    def nrm(k, shape, scale=0.1):
        return jax.random.normal(k, shape, jnp.float32) * scale

    return dict(
        word_emb=nrm(ks[0], (VOCAB, WORD_EMB_DIM), 1.0),
        label_emb=nrm(ks[1], (NUM_LABELS, WORD_EMB_DIM), 1.0),
        w_sent=nrm(ks[2], (WORD_EMB_DIM, GLOBAL_HIDDEN)),
        b_sent=jnp.zeros((1, GLOBAL_HIDDEN), jnp.float32),
        conv_w=nrm(ks[3], (KERNEL_SIZE, NUM_LABELS, NUM_LABELS)),  # [k, cin, cout]
        conv_b=nrm(ks[4], (1, NUM_LABELS)),
        # LSTM gates stacked as (i, f, g, o), matching nn.LSTM.
        wx_f=nrm(ks[5], (4, INPUT_SIZE, LSTM_HIDDEN)),
        wh_f=nrm(ks[6], (4, LSTM_HIDDEN, LSTM_HIDDEN)),
        b_f=nrm(ks[7], (4, 1, LSTM_HIDDEN)),
        wx_b=nrm(ks[8], (4, INPUT_SIZE, LSTM_HIDDEN)),
        wh_b=nrm(ks[9], (4, LSTM_HIDDEN, LSTM_HIDDEN)),
        b_b=nrm(ks[10], (4, 1, LSTM_HIDDEN)),
        w_h2t=nrm(ks[11], (HIDDEN_DIM, NUM_LABELS)),
        b_h2t=nrm(ks[12], (1, NUM_LABELS)),
        w_mem=nrm(ks[13], (WORD_EMB_DIM, HIDDEN_DIM)),
        b_mem=jnp.zeros((1, HIDDEN_DIM), jnp.float32),
        w_m2t=nrm(ks[14], (HIDDEN_DIM, NUM_LABELS)),
        b_m2t=jnp.zeros((1, NUM_LABELS), jnp.float32),
    )


def prepare_kernel_params(p):
    """One-time repack of raw params into the single lane-dense kernel slab."""
    f32 = jnp.float32
    H = LSTM_HIDDEN
    a = float(MEM_ALPHA)
    # Fused 8H gate column order: i, f, o (sigmoid) then g (tanh); raw stacking is
    # (i, f, g, o) -> pick indices (0, 1, 3, 2).
    gate_order = (0, 1, 3, 2)
    wx = jnp.concatenate([jnp.concatenate([p["wx_f"][g], p["wx_b"][g]], axis=1)
                          for g in gate_order], axis=1)                        # (I, 8H)
    bx = jnp.concatenate([jnp.concatenate([p["b_f"][g], p["b_b"][g]], axis=1)
                          for g in gate_order], axis=1)                        # (1, 8H)
    z = jnp.zeros((H, H), f32)
    wh = jnp.concatenate(
        [jnp.concatenate([jnp.concatenate([p["wh_f"][g], z], axis=1),
                          jnp.concatenate([z, p["wh_b"][g]], axis=1)], axis=0)
         for g in gate_order], axis=1)                                         # (2H, 8H)
    le_n = p["label_emb"] / (
        jnp.linalg.norm(p["label_emb"], axis=-1, keepdims=True) + 1e-8)
    wcol = p["conv_w"].reshape(KERNEL_SIZE * NUM_LABELS, NUM_LABELS)           # (K*L, L)

    def pad_lanes(x, w):
        return jnp.pad(x, ((0, 0), (0, w - x.shape[1])))

    slab = jnp.zeros((SLAB_ROWS, 8 * H), f32)

    def put(s, r, x):
        return s.at[r:r + x.shape[0], :x.shape[1]].set(x.astype(f32))

    slab = put(slab, R_WX, wx)
    slab = put(slab, R_WH, wh)
    slab = put(slab, R_BX, bx)
    slab = put(slab, R_LE, le_n.T)
    slab = put(slab, R_WSENT, p["w_sent"])
    slab = put(slab, R_WCONV, wcol)
    slab = put(slab, R_WMEM, p["w_mem"])
    slab = put(slab, R_WH2T, pad_lanes(p["w_h2t"] * (1.0 - a), NLP))
    slab = put(slab, R_WM2T, pad_lanes(p["w_m2t"] * a, NLP))
    slab = put(slab, R_BSENT, p["b_sent"])
    slab = put(slab, R_BCONV, p["conv_b"])
    slab = put(slab, R_BMEM, p["b_mem"])
    slab = put(slab, R_BBLEND, pad_lanes(p["b_h2t"] * (1.0 - a) + p["b_m2t"] * a, NLP))
    return dict(word_emb=p["word_emb"], pslab=slab)


def word_sequence_forward(kparams, word_inputs, word_seq_lengths, mask):
    del word_seq_lengths  # encoded in `mask` (packed-sequence semantics)
    B, S = word_inputs.shape
    # Embedding gather stays in XLA.
    # TODO(synk): gather has no efficient Pallas equivalent at this size.
    word_embs = kparams["word_emb"][word_inputs]                       # (B, S, Dw)
    # Time-major flattening: row = t*B + b.
    we_tm = jnp.transpose(word_embs, (1, 0, 2)).reshape(S * B, WORD_EMB_DIM)
    mask_tm = jnp.transpose(mask.astype(jnp.float32), (1, 0)).reshape(S * B, 1)
    out_tm = fused_word_sequence(we_tm, mask_tm, kparams["pslab"])     # (S*B, 128)
    out = out_tm[:, :NUM_LABELS].reshape(S, B, NUM_LABELS)
    return jnp.transpose(out, (1, 0, 2))                               # (B, S, NL)


# ------------------------------------------------ pure-JAX reference (same math)
def reference_forward(p, word_inputs, mask):
    f32 = jnp.float32
    HIGH = lax.Precision.HIGHEST
    B, S = word_inputs.shape
    m = mask.astype(f32)                                               # (B, S)
    we = p["word_emb"][word_inputs].astype(f32)                        # (B, S, Dw)

    nrm = jnp.sqrt(jnp.sum(we * we, axis=-1, keepdims=True))
    le_n = p["label_emb"] / (
        jnp.linalg.norm(p["label_emb"], axis=-1, keepdims=True) + 1e-8)
    lab = jnp.einsum("bsd,ld->bsl", we / (nrm + 1e-8), le_n, precision=HIGH)

    sh = jnp.tanh(jnp.einsum("bsd,dg->bsg", we, p["w_sent"], precision=HIGH)
                  + p["b_sent"][0])

    pad = KERNEL_SIZE // 2
    lab_p = jnp.pad(lab, ((0, 0), (pad, pad), (0, 0)))
    conv = sum(jnp.einsum("bsl,lm->bsm", lab_p[:, k:k + S, :], p["conv_w"][k],
                          precision=HIGH)
               for k in range(KERNEL_SIZE)) + p["conv_b"][0]
    fmax = jnp.max(jnp.maximum(conv, 0.0), axis=-1)                    # (B, S)
    e = jnp.exp(fmax) * m
    wgt = e / jnp.sum(e, axis=1, keepdims=True)
    rep = jnp.einsum("bs,bsg->bg", wgt, sh, precision=HIGH)            # (B, G)

    x = jnp.concatenate(
        [we, jnp.broadcast_to(rep[:, None, :], (B, S, GLOBAL_HIDDEN))], axis=-1)
    xs = jnp.transpose(x, (1, 0, 2))
    ms = jnp.transpose(m, (1, 0))

    def run_dir(wx, wh, b, xs_, ms_):
        def step(carry, inp):
            h, c = carry
            xt, mt = inp
            g = [jnp.dot(xt, wx[k], precision=HIGH)
                 + jnp.dot(h, wh[k], precision=HIGH) + b[k][0] for k in range(4)]
            i_g, f_g = jax.nn.sigmoid(g[0]), jax.nn.sigmoid(g[1])
            g_g, o_g = jnp.tanh(g[2]), jax.nn.sigmoid(g[3])
            c_new = f_g * c + i_g * g_g
            h_new = o_g * jnp.tanh(c_new)
            mt = mt[:, None]
            h_out = h_new * mt
            return (h_out + (1.0 - mt) * h, c_new * mt + (1.0 - mt) * c), h_out
        init = (jnp.zeros((B, LSTM_HIDDEN), f32), jnp.zeros((B, LSTM_HIDDEN), f32))
        _, hs = lax.scan(step, init, (xs_, ms_))
        return hs

    h_f = run_dir(p["wx_f"], p["wh_f"], p["b_f"], xs, ms)
    h_b = run_dir(p["wx_b"], p["wh_b"], p["b_b"], xs[::-1], ms[::-1])[::-1]
    feat = jnp.transpose(jnp.concatenate([h_f, h_b], axis=-1), (1, 0, 2))

    logits = jnp.einsum("bsh,hl->bsl", feat, p["w_h2t"], precision=HIGH) + p["b_h2t"][0]
    doc_h = jnp.tanh(jnp.einsum("bsd,dh->bsh", we, p["w_mem"], precision=HIGH)
                     + p["b_mem"][0]) * m[..., None]
    doc = jnp.einsum("bsh,hl->bsl", doc_h, p["w_m2t"], precision=HIGH) + p["b_m2t"][0]
    return (1.0 - MEM_ALPHA) * logits + MEM_ALPHA * doc


if __name__ == "__main__":
    key = jax.random.PRNGKey(0)
    pkey, ikey = jax.random.split(key)
    params = init_params(pkey)
    kparams = prepare_kernel_params(params)

    word_inputs = jax.random.randint(ikey, (BATCH, SEQ), 1, VOCAB, dtype=jnp.int32)
    word_seq_lengths = jnp.array([SEQ, SEQ - 3], dtype=jnp.int32)      # sorted desc
    mask = jnp.arange(SEQ)[None, :] < word_seq_lengths[:, None]        # (B, S) bool

    fwd = jax.jit(word_sequence_forward)
    out = jax.block_until_ready(fwd(kparams, word_inputs, word_seq_lengths, mask))
    assert out.shape == (BATCH, SEQ, NUM_LABELS)
    assert bool(jnp.all(jnp.isfinite(out)))

    # Validate the fused gate / packing layout against a pure-JAX reference.
    ref = jax.block_until_ready(jax.jit(reference_forward)(params, word_inputs, mask))
    err = float(jnp.max(jnp.abs(out - ref)))
    assert err < 5e-3, f"kernel/reference mismatch: max abs err = {err}"
    print("KERNEL_OK")
</pallas_src>

<mosaic_0001>
module attributes {stable_mosaic.version = 11 : i64} {
  func.func @_fused_kernel(%arg0: i32, %arg1: memref<16x32xf32, #tpu.memory_space<vmem>>, %arg2: memref<16x1xf32, #tpu.memory_space<vmem>>, %arg3: memref<416x256xf32, #tpu.memory_space<vmem>>, %arg4: memref<16x128xf32, #tpu.memory_space<vmem>>, %arg5: memref<20x16xf32, #tpu.memory_space<vmem>>, %arg6: memref<16x64xf32, #tpu.memory_space<vmem>>) attributes {dimension_semantics = [#tpu.dimension_semantics<arbitrary>], iteration_bounds = array<i64: 1>, scalar_prefetch = 0 : i64, scratch_operands = 2 : i64, tpu.core_type = #tpu.core_type<tc>, window_params = [{pipeline_mode = #tpu.pipeline_mode<synchronous>, transform_indices = @transform_0, window_bounds = array<i64: 16, 32>}, {pipeline_mode = #tpu.pipeline_mode<synchronous>, transform_indices = @transform_1, window_bounds = array<i64: 16, 1>}, {pipeline_mode = #tpu.pipeline_mode<synchronous>, transform_indices = @transform_2, window_bounds = array<i64: 416, 256>}, {pipeline_mode = #tpu.pipeline_mode<synchronous>, transform_indices = @transform_3, window_bounds = array<i64: 16, 128>}]} {
    %c0 = arith.constant 0 : index
    %c0_0 = arith.constant 0 : index
    %0 = vector.load %arg1[%c0, %c0_0] : memref<16x32xf32, #tpu.memory_space<vmem>>, vector<16x32xf32>
    %c0_1 = arith.constant 0 : index
    %c0_2 = arith.constant 0 : index
    %1 = vector.load %arg2[%c0_1, %c0_2] : memref<16x1xf32, #tpu.memory_space<vmem>>, vector<16x1xf32>
    %c0_3 = arith.constant 0 : index
    %c0_4 = arith.constant 0 : index
    %2 = vector.load %arg3[%c0_3, %c0_4] : memref<416x256xf32, #tpu.memory_space<vmem>>, vector<32x256xf32>
    %c32 = arith.constant 32 : index
    %c0_5 = arith.constant 0 : index
    %3 = vector.load %arg3[%c32, %c0_5] : memref<416x256xf32, #tpu.memory_space<vmem>>, vector<32x256xf32>
    %c64 = arith.constant 64 : index
    %c0_6 = arith.constant 0 : index
    %4 = vector.load %arg3[%c64, %c0_6] : memref<416x256xf32, #tpu.memory_space<vmem>>, vector<64x256xf32>
    %c128 = arith.constant 128 : index
    %c0_7 = arith.constant 0 : index
    %5 = vector.load %arg3[%c128, %c0_7] : memref<416x256xf32, #tpu.memory_space<vmem>>, vector<1x256xf32>
    %c136 = arith.constant 136 : index
    %c0_8 = arith.constant 0 : index
    %6 = vector.load %arg3[%c136, %c0_8] : memref<416x256xf32, #tpu.memory_space<vmem>>, vector<32x16xf32>
    %c168 = arith.constant 168 : index
    %c0_9 = arith.constant 0 : index
    %7 = vector.load %arg3[%c168, %c0_9] : memref<416x256xf32, #tpu.memory_space<vmem>>, vector<32x32xf32>
    %c248 = arith.constant 248 : index
    %c0_10 = arith.constant 0 : index
    %8 = vector.load %arg3[%c248, %c0_10] : memref<416x256xf32, #tpu.memory_space<vmem>>, vector<32x64xf32>
    %c280 = arith.constant 280 : index
    %c0_11 = arith.constant 0 : index
    %9 = vector.load %arg3[%c280, %c0_11] : memref<416x256xf32, #tpu.memory_space<vmem>>, vector<64x128xf32>
    %c344 = arith.constant 344 : index
    %c0_12 = arith.constant 0 : index
    %10 = vector.load %arg3[%c344, %c0_12] : memref<416x256xf32, #tpu.memory_space<vmem>>, vector<64x128xf32>
    %c408 = arith.constant 408 : index
    %c0_13 = arith.constant 0 : index
    %11 = vector.load %arg3[%c408, %c0_13] : memref<416x256xf32, #tpu.memory_space<vmem>>, vector<1x32xf32>
    %c409 = arith.constant 409 : index
    %c0_14 = arith.constant 0 : index
    %12 = vector.load %arg3[%c409, %c0_14] : memref<416x256xf32, #tpu.memory_space<vmem>>, vector<1x16xf32>
    %c410 = arith.constant 410 : index
    %c0_15 = arith.constant 0 : index
    %13 = vector.load %arg3[%c410, %c0_15] : memref<416x256xf32, #tpu.memory_space<vmem>>, vector<1x64xf32>
    %c411 = arith.constant 411 : index
    %c0_16 = arith.constant 0 : index
    %14 = vector.load %arg3[%c411, %c0_16] : memref<416x256xf32, #tpu.memory_space<vmem>>, vector<1x128xf32>
    %15 = arith.mulf %0, %0 : vector<16x32xf32>
    %cst = arith.constant dense<0.000000e+00> : vector<16xf32>
    %16 = vector.multi_reduction <add>, %15, %cst [1] : vector<16x32xf32> to vector<16xf32>
    %17 = vector.shape_cast %16 : vector<16xf32> to vector<16x1xf32>
    %18 = math.sqrt %17 : vector<16x1xf32>
    %cst_17 = arith.constant 9.99999993E-9 : f32
    %19 = vector.broadcast %cst_17 : f32 to vector<16x1xf32>
    %20 = arith.addf %18, %19 : vector<16x1xf32>
    %21 = vector.broadcast %20 : vector<16x1xf32> to vector<16x32xf32>
    %22 = arith.divf %0, %21 : vector<16x32xf32>
    %cst_18 = arith.constant dense<0.000000e+00> : vector<16x16xf32>
    %23 = tpu.matmul %22, %6, %cst_18 {dimension_numbers = #tpu.dot_dimension_numbers<[1], [0], [0], [1], [0, 0, 1, 1], [], []>} : vector<16x32xf32>, vector<32x16xf32>, vector<16x16xf32> -> vector<16x16xf32>
    %cst_19 = arith.constant dense<0.000000e+00> : vector<16x32xf32>
    %24 = tpu.matmul %0, %7, %cst_19 {dimension_numbers = #tpu.dot_dimension_numbers<[1], [0], [0], [1], [0, 0, 1, 1], [], []>} : vector<16x32xf32>, vector<32x32xf32>, vector<16x32xf32> -> vector<16x32xf32>
    %25 = vector.broadcast %11 : vector<1x32xf32> to vector<16x32xf32>
    %26 = arith.addf %24, %25 : vector<16x32xf32>
    %27 = math.tanh %26 : vector<16x32xf32>
    %cst_20 = arith.constant 0.000000e+00 : f32
    %28 = vector.broadcast %cst_20 : f32 to vector<2x16xf32>
    %c0_21 = arith.constant 0 : index
    %c0_22 = arith.constant 0 : index
    %29 = vector.load %arg5[%c0_21, %c0_22] : memref<20x16xf32, #tpu.memory_space<vmem>>, vector<2x16xf32>
    tpu.vector_store %arg5[%c0_21, %c0_22], %28 {strides = array<i32>} : memref<20x16xf32, #tpu.memory_space<vmem>>, vector<2x16xf32>,
    %cst_23 = arith.constant 0.000000e+00 : f32
    %30 = vector.broadcast %cst_23 : f32 to vector<2x16xf32>
    %c18 = arith.constant 18 : index
    %c0_24 = arith.constant 0 : index
    %31 = vector.load %arg5[%c18, %c0_24] : memref<20x16xf32, #tpu.memory_space<vmem>>, vector<2x16xf32>
    tpu.vector_store %arg5[%c18, %c0_24], %30 {strides = array<i32>} : memref<20x16xf32, #tpu.memory_space<vmem>>, vector<2x16xf32>,
    %c2 = arith.constant 2 : index
    %c0_25 = arith.constant 0 : index
    %32 = vector.load %arg5[%c2, %c0_25] : memref<20x16xf32, #tpu.memory_space<vmem>>, vector<16x16xf32>
    tpu.vector_store %arg5[%c2, %c0_25], %23 {strides = array<i32>} : memref<20x16xf32, #tpu.memory_space<vmem>>, vector<16x16xf32>,
    %c0_26 = arith.constant 0 : index
    %c0_27 = arith.constant 0 : index
    %33 = vector.load %arg5[%c0_26, %c0_27] : memref<20x16xf32, #tpu.memory_space<vmem>>, vector<16x16xf32>
    %c4 = arith.constant 4 : index
    %c0_28 = arith.constant 0 : index
    %34 = vector.load %arg5[%c4, %c0_28] : memref<20x16xf32, #tpu.memory_space<vmem>>, vector<16x16xf32>
    %c200 = arith.constant 200 : index
    %c0_29 = arith.constant 0 : index
    %35 = vector.load %arg3[%c200, %c0_29] : memref<416x256xf32, #tpu.memory_space<vmem>>, vector<16x16xf32>
    %cst_30 = arith.constant dense<0.000000e+00> : vector<16x16xf32>
    %36 = tpu.matmul %33, %35, %cst_30 {dimension_numbers = #tpu.dot_dimension_numbers<[1], [0], [0], [1], [0, 0, 1, 1], [], []>} : vector<16x16xf32>, vector<16x16xf32>, vector<16x16xf32> -> vector<16x16xf32>
    %c216 = arith.constant 216 : index
    %c0_31 = arith.constant 0 : index
    %37 = vector.load %arg3[%c216, %c0_31] : memref<416x256xf32, #tpu.memory_space<vmem>>, vector<16x16xf32>
    %cst_32 = arith.constant dense<0.000000e+00> : vector<16x16xf32>
    %38 = tpu.matmul %23, %37, %cst_32 {dimension_numbers = #tpu.dot_dimension_numbers<[1], [0], [0], [1], [0, 0, 1, 1], [], []>} : vector<16x16xf32>, vector<16x16xf32>, vector<16x16xf32> -> vector<16x16xf32>
    %39 = arith.addf %36, %38 : vector<16x16xf32>
    %c232 = arith.constant 232 : index
    %c0_33 = arith.constant 0 : index
    %40 = vector.load %arg3[%c232, %c0_33] : memref<416x256xf32, #tpu.memory_space<vmem>>, vector<16x16xf32>
    %cst_34 = arith.constant dense<0.000000e+00> : vector<16x16xf32>
    %41 = tpu.matmul %34, %40, %cst_34 {dimension_numbers = #tpu.dot_dimension_numbers<[1], [0], [0], [1], [0, 0, 1, 1], [], []>} : vector<16x16xf32>, vector<16x16xf32>, vector<16x16xf32> -> vector<16x16xf32>
    %42 = arith.addf %39, %41 : vector<16x16xf32>
    %43 = vector.broadcast %12 : vector<1x16xf32> to vector<16x16xf32>
    %44 = arith.addf %42, %43 : vector<16x16xf32>
    %cst_35 = arith.constant 0.000000e+00 : f32
    %45 = vector.broadcast %cst_35 : f32 to vector<16x16xf32>
    %46 = arith.maximumf %44, %45 : vector<16x16xf32>
    %cst_36 = arith.constant dense<0xFF800000> : vector<16xf32>
    %47 = vector.multi_reduction <maximumf>, %46, %cst_36 [1] : vector<16x16xf32> to vector<16xf32>
    %48 = vector.shape_cast %47 : vector<16xf32> to vector<16x1xf32>
    %cst_37 = arith.constant 0.000000e+00 : f32
    %49 = vector.broadcast %cst_37 : f32 to vector<16x1xf32>
    %50 = arith.cmpf ogt, %1, %49 : vector<16x1xf32>
    %cst_38 = arith.constant -1.000000e+30 : f32
    %51 = vector.broadcast %cst_38 : f32 to vector<16x1xf32>
    %52 = arith.select %50, %48, %51 : vector<16x1xi1>, vector<16x1xf32>
    %cst_39 = arith.constant dense<0xFF800000> : vector<1xf32>
    %53 = vector.multi_reduction <maximumf>, %52, %cst_39 [0] : vector<16x1xf32> to vector<1xf32>
    %54 = vector.shape_cast %53 : vector<1xf32> to vector<1x1xf32>
    %55 = vector.broadcast %54 : vector<1x1xf32> to vector<16x1xf32>
    %56 = arith.subf %48, %55 : vector<16x1xf32>
    %57 = math.exp %56 : vector<16x1xf32>
    %cst_40 = arith.constant 0.000000e+00 : f32
    %58 = vector.broadcast %cst_40 : f32 to vector<16x1xf32>
    %59 = arith.select %50, %57, %58 : vector<16x1xi1>, vector<16x1xf32>
    %60 = tpu.iota {dimensions = array<i32: 1>} : vector<2x16xi32>
    %61 = tpu.iota {dimensions = array<i32: 0>} : vector<2x16xi32>
    %c2_i32 = arith.constant 2 : i32
    %c0_i32 = arith.constant 0 : i32
    %62 = arith.cmpi eq, %c2_i32, %c0_i32 : i32
    %c1_i32 = arith.constant 1 : i32
    %63 = arith.select %62, %c1_i32, %c2_i32 : i32
    %64 = vector.broadcast %63 : i32 to vector<2x16xi32>
    %65 = arith.remsi %60, %64 : vector<2x16xi32>
    %c0_i32_41 = arith.constant 0 : i32
    %66 = vector.broadcast %c0_i32_41 : i32 to vector<2x16xi32>
    %67 = arith.cmpi ne, %65, %66 : vector<2x16xi32>
    %c0_i32_42 = arith.constant 0 : i32
    %68 = vector.broadcast %c0_i32_42 : i32 to vector<2x16xi32>
    %69 = arith.cmpi slt, %65, %68 : vector<2x16xi32>
    %c0_i32_43 = arith.constant 0 : i32
    %70 = arith.cmpi slt, %63, %c0_i32_43 : i32
    %71 = vector.broadcast %70 : i1 to vector<2x16xi1>
    %72 = vector.broadcast %71 : vector<2x16xi1> to vector<2x16xi1>
    %73 = arith.xori %69, %72 : vector<2x16xi1>
    %74 = arith.andi %73, %67 : vector<2x16xi1>
    %75 = vector.broadcast %63 : i32 to vector<2x16xi32>
    %76 = arith.addi %65, %75 : vector<2x16xi32>
    %77 = arith.select %74, %76, %65 : vector<2x16xi1>, vector<2x16xi32>
    %78 = arith.cmpi eq, %77, %61 : vector<2x16xi32>
    %79 = arith.extui %78 : vector<2x16xi1> to vector<2x16xi32>
    %80 = arith.sitofp %79 : vector<2x16xi32> to vector<2x16xf32>
    %81 = vector.broadcast %59 : vector<16x1xf32> to vector<16x32xf32>
    %82 = arith.mulf %81, %27 : vector<16x32xf32>
    %83 = tpu.concatenate %82, %59 in 1 : vector<16x32xf32>, vector<16x1xf32> -> vector<16x33xf32>
    %cst_44 = arith.constant dense<0.000000e+00> : vector<2x33xf32>
    %84 = tpu.matmul %80, %83, %cst_44 {dimension_numbers = #tpu.dot_dimension_numbers<[1], [0], [0], [1], [0, 0, 1, 1], [], []>} : vector<2x16xf32>, vector<16x33xf32>, vector<2x33xf32> -> vector<2x33xf32>
    %85 = vector.extract_strided_slice %84 {offsets = [0, 0], sizes = [2, 32], strides = [1, 1]} : vector<2x33xf32> to vector<2x32xf32>
    %86 = vector.extract_strided_slice %84 {offsets = [0, 32], sizes = [2, 1], strides = [1, 1]} : vector<2x33xf32> to vector<2x1xf32>
    %cst_45 = arith.constant 0.000000e+00 : f32
    %87 = vector.broadcast %cst_45 : f32 to vector<2x1xf32>
    %88 = arith.cmpf ogt, %86, %87 : vector<2x1xf32>
    %cst_46 = arith.constant 1.000000e+00 : f32
    %89 = vector.broadcast %cst_46 : f32 to vector<2x1xf32>
    %90 = arith.select %88, %86, %89 : vector<2x1xi1>, vector<2x1xf32>
    %91 = vector.broadcast %90 : vector<2x1xf32> to vector<2x32xf32>
    %92 = arith.divf %85, %91 : vector<2x32xf32>
    %cst_47 = arith.constant dense<0.000000e+00> : vector<16x256xf32>
    %93 = tpu.matmul %0, %2, %cst_47 {dimension_numbers = #tpu.dot_dimension_numbers<[1], [0], [0], [1], [0, 0, 1, 1], [], []>} : vector<16x32xf32>, vector<32x256xf32>, vector<16x256xf32> -> vector<16x256xf32>
    %94 = vector.broadcast %5 : vector<1x256xf32> to vector<16x256xf32>
    %95 = arith.addf %93, %94 : vector<16x256xf32>
    %cst_48 = arith.constant dense<0.000000e+00> : vector<2x256xf32>
    %96 = tpu.matmul %92, %3, %cst_48 {dimension_numbers = #tpu.dot_dimension_numbers<[1], [0], [0], [1], [0, 0, 1, 1], [], []>} : vector<2x32xf32>, vector<32x256xf32>, vector<2x256xf32> -> vector<2x256xf32>
    %97 = tpu.iota {dimensions = array<i32: 1>} : vector<2x64xi32>
    %c32_i32 = arith.constant 32 : i32
    %98 = vector.broadcast %c32_i32 : i32 to vector<2x64xi32>
    %99 = arith.cmpi slt, %97, %98 : vector<2x64xi32>
    %100 = tpu.iota {dimensions = array<i32: 1>} : vector<2x256xi32>
    %c64_i32 = arith.constant 64 : i32
    %c0_i32_49 = arith.constant 0 : i32
    %101 = arith.cmpi eq, %c64_i32, %c0_i32_49 : i32
    %c1_i32_50 = arith.constant 1 : i32
    %102 = arith.select %101, %c1_i32_50, %c64_i32 : i32
    %103 = vector.broadcast %102 : i32 to vector<2x256xi32>
    %104 = arith.remsi %100, %103 : vector<2x256xi32>
    %c0_i32_51 = arith.constant 0 : i32
    %105 = vector.broadcast %c0_i32_51 : i32 to vector<2x256xi32>
    %106 = arith.cmpi ne, %104, %105 : vector<2x256xi32>
    %c0_i32_52 = arith.constant 0 : i32
    %107 = vector.broadcast %c0_i32_52 : i32 to vector<2x256xi32>
    %108 = arith.cmpi slt, %104, %107 : vector<2x256xi32>
    %c0_i32_53 = arith.constant 0 : i32
    %109 = arith.cmpi slt, %102, %c0_i32_53 : i32
    %110 = vector.broadcast %109 : i1 to vector<2x256xi1>
    %111 = vector.broadcast %110 : vector<2x256xi1> to vector<2x256xi1>
    %112 = arith.xori %108, %111 : vector<2x256xi1>
    %113 = arith.andi %112, %106 : vector<2x256xi1>
    %114 = vector.broadcast %102 : i32 to vector<2x256xi32>
    %115 = arith.addi %104, %114 : vector<2x256xi32>
    %116 = arith.select %113, %115, %104 : vector<2x256xi1>, vector<2x256xi32>
    %c32_i32_54 = arith.constant 32 : i32
    %117 = vector.broadcast %c32_i32_54 : i32 to vector<2x256xi32>
    %118 = arith.cmpi slt, %116, %117 : vector<2x256xi32>
    %cst_55 = arith.constant 0.000000e+00 : f32
    %119 = vector.broadcast %cst_55 : f32 to vector<2x64xf32>
    %cst_56 = arith.constant 0.000000e+00 : f32
    %120 = vector.broadcast %cst_56 : f32 to vector<2x64xf32>
    %121 = vector.extract_strided_slice %95 {offsets = [0, 0], sizes = [2, 256], strides = [1, 1]} : vector<16x256xf32> to vector<2x256xf32>
    %122 = vector.extract_strided_slice %95 {offsets = [14, 0], sizes = [2, 256], strides = [1, 1]} : vector<16x256xf32> to vector<2x256xf32>
    %123 = arith.select %118, %121, %122 : vector<2x256xi1>, vector<2x256xf32>
    %124 = arith.addf %123, %96 : vector<2x256xf32>
    %cst_57 = arith.constant dense<0.000000e+00> : vector<2x256xf32>
    %125 = tpu.matmul %119, %4, %cst_57 {dimension_numbers = #tpu.dot_dimension_numbers<[1], [0], [0], [1], [0, 0, 1, 1], [], []>} : vector<2x64xf32>, vector<64x256xf32>, vector<2x256xf32> -> vector<2x256xf32>
    %126 = arith.addf %124, %125 : vector<2x256xf32>
    %127 = vector.extract_strided_slice %126 {offsets = [0, 0], sizes = [2, 192], strides = [1, 1]} : vector<2x256xf32> to vector<2x192xf32>
    %128 = arith.negf %127 : vector<2x192xf32>
    %129 = math.exp %128 : vector<2x192xf32>
    %cst_58 = arith.constant 1.000000e+00 : f32
    %130 = vector.broadcast %cst_58 : f32 to vector<2x192xf32>
    %131 = arith.addf %130, %129 : vector<2x192xf32>
    %132 = arith.divf %130, %131 : vector<2x192xf32>
    %133 = vector.extract_strided_slice %126 {offsets = [0, 192], sizes = [2, 64], strides = [1, 1]} : vector<2x256xf32> to vector<2x64xf32>
    %134 = math.tanh %133 : vector<2x64xf32>
    %135 = vector.extract_strided_slice %132 {offsets = [0, 64], sizes = [2, 64], strides = [1, 1]} : vector<2x192xf32> to vector<2x64xf32>
    %136 = arith.mulf %135, %120 : vector<2x64xf32>
    %137 = vector.extract_strided_slice %132 {offsets = [0, 0], sizes = [2, 64], strides = [1, 1]} : vector<2x192xf32> to vector<2x64xf32>
    %138 = arith.mulf %137, %134 : vector<2x64xf32>
    %139 = arith.addf %136, %138 : vector<2x64xf32>
    %140 = vector.extract_strided_slice %132 {offsets = [0, 128], sizes = [2, 64], strides = [1, 1]} : vector<2x192xf32> to vector<2x64xf32>
    %141 = math.tanh %139 : vector<2x64xf32>
    %142 = arith.mulf %140, %141 : vector<2x64xf32>
    %143 = vector.extract_strided_slice %1 {offsets = [0, 0], sizes = [2, 1], strides = [1, 1]} : vector<16x1xf32> to vector<2x1xf32>
    %144 = vector.extract_strided_slice %1 {offsets = [14, 0], sizes = [2, 1], strides = [1, 1]} : vector<16x1xf32> to vector<2x1xf32>
    %145 = vector.shape_cast %143 : vector<2x1xf32> to vector<2x1xf32>
    %146 = vector.broadcast %145 : vector<2x1xf32> to vector<2x64xf32>
    %147 = vector.shape_cast %144 : vector<2x1xf32> to vector<2x1xf32>
    %148 = vector.broadcast %147 : vector<2x1xf32> to vector<2x64xf32>
    %149 = arith.select %99, %146, %148 : vector<2x64xi1>, vector<2x64xf32>
    %150 = arith.mulf %142, %149 : vector<2x64xf32>
    %cst_59 = arith.constant 1.000000e+00 : f32
    %151 = vector.broadcast %cst_59 : f32 to vector<2x64xf32>
    %152 = arith.subf %151, %149 : vector<2x64xf32>
    %153 = arith.mulf %152, %119 : vector<2x64xf32>
    %154 = arith.addf %150, %153 : vector<2x64xf32>
    %155 = arith.mulf %139, %149 : vector<2x64xf32>
    %cst_60 = arith.constant 1.000000e+00 : f32
    %156 = vector.broadcast %cst_60 : f32 to vector<2x64xf32>
    %157 = arith.subf %156, %149 : vector<2x64xf32>
    %158 = arith.mulf %157, %120 : vector<2x64xf32>
    %159 = arith.addf %155, %158 : vector<2x64xf32>
    %160 = vector.extract_strided_slice %150 {offsets = [0, 0], sizes = [2, 32], strides = [1, 1]} : vector<2x64xf32> to vector<2x32xf32>
    %c0_61 = arith.constant 0 : index
    %c0_62 = arith.constant 0 : index
    %161 = vector.load %arg6[%c0_61, %c0_62] : memref<16x64xf32, #tpu.memory_space<vmem>>, vector<2x32xf32>
    tpu.vector_store %arg6[%c0_61, %c0_62], %160 {strides = array<i32>} : memref<16x64xf32, #tpu.memory_space<vmem>>, vector<2x32xf32>,
    %162 = vector.extract_strided_slice %150 {offsets = [0, 32], sizes = [2, 32], strides = [1, 1]} : vector<2x64xf32> to vector<2x32xf32>
    %c14 = arith.constant 14 : index
    %c32_63 = arith.constant 32 : index
    %163 = vector.load %arg6[%c14, %c32_63] : memref<16x64xf32, #tpu.memory_space<vmem>>, vector<2x32xf32>
    tpu.vector_store %arg6[%c14, %c32_63], %162 {strides = array<i32>} : memref<16x64xf32, #tpu.memory_space<vmem>>, vector<2x32xf32>,
    %164 = vector.extract_strided_slice %95 {offsets = [2, 0], sizes = [2, 256], strides = [1, 1]} : vector<16x256xf32> to vector<2x256xf32>
    %165 = vector.extract_strided_slice %95 {offsets = [12, 0], sizes = [2, 256], strides = [1, 1]} : vector<16x256xf32> to vector<2x256xf32>
    %166 = arith.select %118, %164, %165 : vector<2x256xi1>, vector<2x256xf32>
    %167 = arith.addf %166, %96 : vector<2x256xf32>
    %cst_64 = arith.constant dense<0.000000e+00> : vector<2x256xf32>
    %168 = tpu.matmul %154, %4, %cst_64 {dimension_numbers = #tpu.dot_dimension_numbers<[1], [0], [0], [1], [0, 0, 1, 1], [], []>} : vector<2x64xf32>, vector<64x256xf32>, vector<2x256xf32> -> vector<2x256xf32>
    %169 = arith.addf %167, %168 : vector<2x256xf32>
    %170 = vector.extract_strided_slice %169 {offsets = [0, 0], sizes = [2, 192], strides = [1, 1]} : vector<2x256xf32> to vector<2x192xf32>
    %171 = arith.negf %170 : vector<2x192xf32>
    %172 = math.exp %171 : vector<2x192xf32>
    %cst_65 = arith.constant 1.000000e+00 : f32
    %173 = vector.broadcast %cst_65 : f32 to vector<2x192xf32>
    %174 = arith.addf %173, %172 : vector<2x192xf32>
    %175 = arith.divf %173, %174 : vector<2x192xf32>
    %176 = vector.extract_strided_slice %169 {offsets = [0, 192], sizes = [2, 64], strides = [1, 1]} : vector<2x256xf32> to vector<2x64xf32>
    %177 = math.tanh %176 : vector<2x64xf32>
    %178 = vector.extract_strided_slice %175 {offsets = [0, 64], sizes = [2, 64], strides = [1, 1]} : vector<2x192xf32> to vector<2x64xf32>
    %179 = arith.mulf %178, %159 : vector<2x64xf32>
    %180 = vector.extract_strided_slice %175 {offsets = [0, 0], sizes = [2, 64], strides = [1, 1]} : vector<2x192xf32> to vector<2x64xf32>
    %181 = arith.mulf %180, %177 : vector<2x64xf32>
    %182 = arith.addf %179, %181 : vector<2x64xf32>
    %183 = vector.extract_strided_slice %175 {offsets = [0, 128], sizes = [2, 64], strides = [1, 1]} : vector<2x192xf32> to vector<2x64xf32>
    %184 = math.tanh %182 : vector<2x64xf32>
    %185 = arith.mulf %183, %184 : vector<2x64xf32>
    %186 = vector.extract_strided_slice %1 {offsets = [2, 0], sizes = [2, 1], strides = [1, 1]} : vector<16x1xf32> to vector<2x1xf32>
    %187 = vector.extract_strided_slice %1 {offsets = [12, 0], sizes = [2, 1], strides = [1, 1]} : vector<16x1xf32> to vector<2x1xf32>
    %188 = vector.shape_cast %186 : vector<2x1xf32> to vector<2x1xf32>
    %189 = vector.broadcast %188 : vector<2x1xf32> to vector<2x64xf32>
    %190 = vector.shape_cast %187 : vector<2x1xf32> to vector<2x1xf32>
    %191 = vector.broadcast %190 : vector<2x1xf32> to vector<2x64xf32>
    %192 = arith.select %99, %189, %191 : vector<2x64xi1>, vector<2x64xf32>
    %193 = arith.mulf %185, %192 : vector<2x64xf32>
    %cst_66 = arith.constant 1.000000e+00 : f32
    %194 = vector.broadcast %cst_66 : f32 to vector<2x64xf32>
    %195 = arith.subf %194, %192 : vector<2x64xf32>
    %196 = arith.mulf %195, %154 : vector<2x64xf32>
    %197 = arith.addf %193, %196 : vector<2x64xf32>
    %198 = arith.mulf %182, %192 : vector<2x64xf32>
    %cst_67 = arith.constant 1.000000e+00 : f32
    %199 = vector.broadcast %cst_67 : f32 to vector<2x64xf32>
    %200 = arith.subf %199, %192 : vector<2x64xf32>
    %201 = arith.mulf %200, %159 : vector<2x64xf32>
    %202 = arith.addf %198, %201 : vector<2x64xf32>
    %203 = vector.extract_strided_slice %193 {offsets = [0, 0], sizes = [2, 32], strides = [1, 1]} : vector<2x64xf32> to vector<2x32xf32>
    %c2_68 = arith.constant 2 : index
    %c0_69 = arith.constant 0 : index
    %204 = vector.load %arg6[%c2_68, %c0_69] : memref<16x64xf32, #tpu.memory_space<vmem>>, vector<2x32xf32>
    tpu.vector_store %arg6[%c2_68, %c0_69], %203 {strides = array<i32>} : memref<16x64xf32, #tpu.memory_space<vmem>>, vector<2x32xf32>,
    %205 = vector.extract_strided_slice %193 {offsets = [0, 32], sizes = [2, 32], strides = [1, 1]} : vector<2x64xf32> to vector<2x32xf32>
    %c12 = arith.constant 12 : index
    %c32_70 = arith.constant 32 : index
    %206 = vector.load %arg6[%c12, %c32_70] : memref<16x64xf32, #tpu.memory_space<vmem>>, vector<2x32xf32>
    tpu.vector_store %arg6[%c12, %c32_70], %205 {strides = array<i32>} : memref<16x64xf32, #tpu.memory_space<vmem>>, vector<2x32xf32>,
    %207 = vector.extract_strided_slice %95 {offsets = [4, 0], sizes = [2, 256], strides = [1, 1]} : vector<16x256xf32> to vector<2x256xf32>
    %208 = vector.extract_strided_slice %95 {offsets = [10, 0], sizes = [2, 256], strides = [1, 1]} : vector<16x256xf32> to vector<2x256xf32>
    %209 = arith.select %118, %207, %208 : vector<2x256xi1>, vector<2x256xf32>
    %210 = arith.addf %209, %96 : vector<2x256xf32>
    %cst_71 = arith.constant dense<0.000000e+00> : vector<2x256xf32>
    %211 = tpu.matmul %197, %4, %cst_71 {dimension_numbers = #tpu.dot_dimension_numbers<[1], [0], [0], [1], [0, 0, 1, 1], [], []>} : vector<2x64xf32>, vector<64x256xf32>, vector<2x256xf32> -> vector<2x256xf32>
    %212 = arith.addf %210, %211 : vector<2x256xf32>
    %213 = vector.extract_strided_slice %212 {offsets = [0, 0], sizes = [2, 192], strides = [1, 1]} : vector<2x256xf32> to vector<2x192xf32>
    %214 = arith.negf %213 : vector<2x192xf32>
    %215 = math.exp %214 : vector<2x192xf32>
    %cst_72 = arith.constant 1.000000e+00 : f32
    %216 = vector.broadcast %cst_72 : f32 to vector<2x192xf32>
    %217 = arith.addf %216, %215 : vector<2x192xf32>
    %218 = arith.divf %216, %217 : vector<2x192xf32>
    %219 = vector.extract_strided_slice %212 {offsets = [0, 192], sizes = [2, 64], strides = [1, 1]} : vector<2x256xf32> to vector<2x64xf32>
    %220 = math.tanh %219 : vector<2x64xf32>
    %221 = vector.extract_strided_slice %218 {offsets = [0, 64], sizes = [2, 64], strides = [1, 1]} : vector<2x192xf32> to vector<2x64xf32>
    %222 = arith.mulf %221, %202 : vector<2x64xf32>
    %223 = vector.extract_strided_slice %218 {offsets = [0, 0], sizes = [2, 64], strides = [1, 1]} : vector<2x192xf32> to vector<2x64xf32>
    %224 = arith.mulf %223, %220 : vector<2x64xf32>
    %225 = arith.addf %222, %224 : vector<2x64xf32>
    %226 = vector.extract_strided_slice %218 {offsets = [0, 128], sizes = [2, 64], strides = [1, 1]} : vector<2x192xf32> to vector<2x64xf32>
    %227 = math.tanh %225 : vector<2x64xf32>
    %228 = arith.mulf %226, %227 : vector<2x64xf32>
    %229 = vector.extract_strided_slice %1 {offsets = [4, 0], sizes = [2, 1], strides = [1, 1]} : vector<16x1xf32> to vector<2x1xf32>
    %230 = vector.extract_strided_slice %1 {offsets = [10, 0], sizes = [2, 1], strides = [1, 1]} : vector<16x1xf32> to vector<2x1xf32>
    %231 = vector.shape_cast %229 : vector<2x1xf32> to vector<2x1xf32>
    %232 = vector.broadcast %231 : vector<2x1xf32> to vector<2x64xf32>
    %233 = vector.shape_cast %230 : vector<2x1xf32> to vector<2x1xf32>
    %234 = vector.broadcast %233 : vector<2x1xf32> to vector<2x64xf32>
    %235 = arith.select %99, %232, %234 : vector<2x64xi1>, vector<2x64xf32>
    %236 = arith.mulf %228, %235 : vector<2x64xf32>
    %cst_73 = arith.constant 1.000000e+00 : f32
    %237 = vector.broadcast %cst_73 : f32 to vector<2x64xf32>
    %238 = arith.subf %237, %235 : vector<2x64xf32>
    %239 = arith.mulf %238, %197 : vector<2x64xf32>
    %240 = arith.addf %236, %239 : vector<2x64xf32>
    %241 = arith.mulf %225, %235 : vector<2x64xf32>
    %cst_74 = arith.constant 1.000000e+00 : f32
    %242 = vector.broadcast %cst_74 : f32 to vector<2x64xf32>
    %243 = arith.subf %242, %235 : vector<2x64xf32>
    %244 = arith.mulf %243, %202 : vector<2x64xf32>
    %245 = arith.addf %241, %244 : vector<2x64xf32>
    %246 = vector.extract_strided_slice %236 {offsets = [0, 0], sizes = [2, 32], strides = [1, 1]} : vector<2x64xf32> to vector<2x32xf32>
    %c4_75 = arith.constant 4 : index
    %c0_76 = arith.constant 0 : index
    %247 = vector.load %arg6[%c4_75, %c0_76] : memref<16x64xf32, #tpu.memory_space<vmem>>, vector<2x32xf32>
    tpu.vector_store %arg6[%c4_75, %c0_76], %246 {strides = array<i32>} : memref<16x64xf32, #tpu.memory_space<vmem>>, vector<2x32xf32>,
    %248 = vector.extract_strided_slice %236 {offsets = [0, 32], sizes = [2, 32], strides = [1, 1]} : vector<2x64xf32> to vector<2x32xf32>
    %c10 = arith.constant 10 : index
    %c32_77 = arith.constant 32 : index
    %249 = vector.load %arg6[%c10, %c32_77] : memref<16x64xf32, #tpu.memory_space<vmem>>, vector<2x32xf32>
    tpu.vector_store %arg6[%c10, %c32_77], %248 {strides = array<i32>} : memref<16x64xf32, #tpu.memory_space<vmem>>, vector<2x32xf32>,
    %250 = vector.extract_strided_slice %95 {offsets = [6, 0], sizes = [2, 256], strides = [1, 1]} : vector<16x256xf32> to vector<2x256xf32>
    %251 = vector.extract_strided_slice %95 {offsets = [8, 0], sizes = [2, 256], strides = [1, 1]} : vector<16x256xf32> to vector<2x256xf32>
    %252 = arith.select %118, %250, %251 : vector<2x256xi1>, vector<2x256xf32>
    %253 = arith.addf %252, %96 : vector<2x256xf32>
    %cst_78 = arith.constant dense<0.000000e+00> : vector<2x256xf32>
    %254 = tpu.matmul %240, %4, %cst_78 {dimension_numbers = #tpu.dot_dimension_numbers<[1], [0], [0], [1], [0, 0, 1, 1], [], []>} : vector<2x64xf32>, vector<64x256xf32>, vector<2x256xf32> -> vector<2x256xf32>
    %255 = arith.addf %253, %254 : vector<2x256xf32>
    %256 = vector.extract_strided_slice %255 {offsets = [0, 0], sizes = [2, 192], strides = [1, 1]} : vector<2x256xf32> to vector<2x192xf32>
    %257 = arith.negf %256 : vector<2x192xf32>
    %258 = math.exp %257 : vector<2x192xf32>
    %cst_79 = arith.constant 1.000000e+00 : f32
    %259 = vector.broadcast %cst_79 : f32 to vector<2x192xf32>
    %260 = arith.addf %259, %258 : vector<2x192xf32>
    %261 = arith.divf %259, %260 : vector<2x192xf32>
    %262 = vector.extract_strided_slice %255 {offsets = [0, 192], sizes = [2, 64], strides = [1, 1]} : vector<2x256xf32> to vector<2x64xf32>
    %263 = math.tanh %262 : vector<2x64xf32>
    %264 = vector.extract_strided_slice %261 {offsets = [0, 64], sizes = [2, 64], strides = [1, 1]} : vector<2x192xf32> to vector<2x64xf32>
    %265 = arith.mulf %264, %245 : vector<2x64xf32>
    %266 = vector.extract_strided_slice %261 {offsets = [0, 0], sizes = [2, 64], strides = [1, 1]} : vector<2x192xf32> to vector<2x64xf32>
    %267 = arith.mulf %266, %263 : vector<2x64xf32>
    %268 = arith.addf %265, %267 : vector<2x64xf32>
    %269 = vector.extract_strided_slice %261 {offsets = [0, 128], sizes = [2, 64], strides = [1, 1]} : vector<2x192xf32> to vector<2x64xf32>
    %270 = math.tanh %268 : vector<2x64xf32>
    %271 = arith.mulf %269, %270 : vector<2x64xf32>
    %272 = vector.extract_strided_slice %1 {offsets = [6, 0], sizes = [2, 1], strides = [1, 1]} : vector<16x1xf32> to vector<2x1xf32>
    %273 = vector.extract_strided_slice %1 {offsets = [8, 0], sizes = [2, 1], strides = [1, 1]} : vector<16x1xf32> to vector<2x1xf32>
    %274 = vector.shape_cast %272 : vector<2x1xf32> to vector<2x1xf32>
    %275 = vector.broadcast %274 : vector<2x1xf32> to vector<2x64xf32>
    %276 = vector.shape_cast %273 : vector<2x1xf32> to vector<2x1xf32>
    %277 = vector.broadcast %276 : vector<2x1xf32> to vector<2x64xf32>
    %278 = arith.select %99, %275, %277 : vector<2x64xi1>, vector<2x64xf32>
    %279 = arith.mulf %271, %278 : vector<2x64xf32>
    %cst_80 = arith.constant 1.000000e+00 : f32
    %280 = vector.broadcast %cst_80 : f32 to vector<2x64xf32>
    %281 = arith.subf %280, %278 : vector<2x64xf32>
    %282 = arith.mulf %281, %240 : vector<2x64xf32>
    %283 = arith.addf %279, %282 : vector<2x64xf32>
    %284 = arith.mulf %268, %278 : vector<2x64xf32>
    %cst_81 = arith.constant 1.000000e+00 : f32
    %285 = vector.broadcast %cst_81 : f32 to vector<2x64xf32>
    %286 = arith.subf %285, %278 : vector<2x64xf32>
    %287 = arith.mulf %286, %245 : vector<2x64xf32>
    %288 = arith.addf %284, %287 : vector<2x64xf32>
    %289 = vector.extract_strided_slice %279 {offsets = [0, 0], sizes = [2, 32], strides = [1, 1]} : vector<2x64xf32> to vector<2x32xf32>
    %c6 = arith.constant 6 : index
    %c0_82 = arith.constant 0 : index
    %290 = vector.load %arg6[%c6, %c0_82] : memref<16x64xf32, #tpu.memory_space<vmem>>, vector<2x32xf32>
    tpu.vector_store %arg6[%c6, %c0_82], %289 {strides = array<i32>} : memref<16x64xf32, #tpu.memory_space<vmem>>, vector<2x32xf32>,
    %291 = vector.extract_strided_slice %279 {offsets = [0, 32], sizes = [2, 32], strides = [1, 1]} : vector<2x64xf32> to vector<2x32xf32>
    %c8 = arith.constant 8 : index
    %c32_83 = arith.constant 32 : index
    %292 = vector.load %arg6[%c8, %c32_83] : memref<16x64xf32, #tpu.memory_space<vmem>>, vector<2x32xf32>
    tpu.vector_store %arg6[%c8, %c32_83], %291 {strides = array<i32>} : memref<16x64xf32, #tpu.memory_space<vmem>>, vector<2x32xf32>,
    %293 = vector.extract_strided_slice %95 {offsets = [8, 0], sizes = [2, 256], strides = [1, 1]} : vector<16x256xf32> to vector<2x256xf32>
    %294 = vector.extract_strided_slice %95 {offsets = [6, 0], sizes = [2, 256], strides = [1, 1]} : vector<16x256xf32> to vector<2x256xf32>
    %295 = arith.select %118, %293, %294 : vector<2x256xi1>, vector<2x256xf32>
    %296 = arith.addf %295, %96 : vector<2x256xf32>
    %cst_84 = arith.constant dense<0.000000e+00> : vector<2x256xf32>
    %297 = tpu.matmul %283, %4, %cst_84 {dimension_numbers = #tpu.dot_dimension_numbers<[1], [0], [0], [1], [0, 0, 1, 1], [], []>} : vector<2x64xf32>, vector<64x256xf32>, vector<2x256xf32> -> vector<2x256xf32>
    %298 = arith.addf %296, %297 : vector<2x256xf32>
    %299 = vector.extract_strided_slice %298 {offsets = [0, 0], sizes = [2, 192], strides = [1, 1]} : vector<2x256xf32> to vector<2x192xf32>
    %300 = arith.negf %299 : vector<2x192xf32>
    %301 = math.exp %300 : vector<2x192xf32>
    %cst_85 = arith.constant 1.000000e+00 : f32
    %302 = vector.broadcast %cst_85 : f32 to vector<2x192xf32>
    %303 = arith.addf %302, %301 : vector<2x192xf32>
    %304 = arith.divf %302, %303 : vector<2x192xf32>
    %305 = vector.extract_strided_slice %298 {offsets = [0, 192], sizes = [2, 64], strides = [1, 1]} : vector<2x256xf32> to vector<2x64xf32>
    %306 = math.tanh %305 : vector<2x64xf32>
    %307 = vector.extract_strided_slice %304 {offsets = [0, 64], sizes = [2, 64], strides = [1, 1]} : vector<2x192xf32> to vector<2x64xf32>
    %308 = arith.mulf %307, %288 : vector<2x64xf32>
    %309 = vector.extract_strided_slice %304 {offsets = [0, 0], sizes = [2, 64], strides = [1, 1]} : vector<2x192xf32> to vector<2x64xf32>
    %310 = arith.mulf %309, %306 : vector<2x64xf32>
    %311 = arith.addf %308, %310 : vector<2x64xf32>
    %312 = vector.extract_strided_slice %304 {offsets = [0, 128], sizes = [2, 64], strides = [1, 1]} : vector<2x192xf32> to vector<2x64xf32>
    %313 = math.tanh %311 : vector<2x64xf32>
    %314 = arith.mulf %312, %313 : vector<2x64xf32>
    %315 = vector.extract_strided_slice %1 {offsets = [8, 0], sizes = [2, 1], strides = [1, 1]} : vector<16x1xf32> to vector<2x1xf32>
    %316 = vector.extract_strided_slice %1 {offsets = [6, 0], sizes = [2, 1], strides = [1, 1]} : vector<16x1xf32> to vector<2x1xf32>
    %317 = vector.shape_cast %315 : vector<2x1xf32> to vector<2x1xf32>
    %318 = vector.broadcast %317 : vector<2x1xf32> to vector<2x64xf32>
    %319 = vector.shape_cast %316 : vector<2x1xf32> to vector<2x1xf32>
    %320 = vector.broadcast %319 : vector<2x1xf32> to vector<2x64xf32>
    %321 = arith.select %99, %318, %320 : vector<2x64xi1>, vector<2x64xf32>
    %322 = arith.mulf %314, %321 : vector<2x64xf32>
    %cst_86 = arith.constant 1.000000e+00 : f32
    %323 = vector.broadcast %cst_86 : f32 to vector<2x64xf32>
    %324 = arith.subf %323, %321 : vector<2x64xf32>
    %325 = arith.mulf %324, %283 : vector<2x64xf32>
    %326 = arith.addf %322, %325 : vector<2x64xf32>
    %327 = arith.mulf %311, %321 : vector<2x64xf32>
    %cst_87 = arith.constant 1.000000e+00 : f32
    %328 = vector.broadcast %cst_87 : f32 to vector<2x64xf32>
    %329 = arith.subf %328, %321 : vector<2x64xf32>
    %330 = arith.mulf %329, %288 : vector<2x64xf32>
    %331 = arith.addf %327, %330 : vector<2x64xf32>
    %332 = vector.extract_strided_slice %322 {offsets = [0, 0], sizes = [2, 32], strides = [1, 1]} : vector<2x64xf32> to vector<2x32xf32>
    %c8_88 = arith.constant 8 : index
    %c0_89 = arith.constant 0 : index
    %333 = vector.load %arg6[%c8_88, %c0_89] : memref<16x64xf32, #tpu.memory_space<vmem>>, vector<2x32xf32>
    tpu.vector_store %arg6[%c8_88, %c0_89], %332 {strides = array<i32>} : memref<16x64xf32, #tpu.memory_space<vmem>>, vector<2x32xf32>,
    %334 = vector.extract_strided_slice %322 {offsets = [0, 32], sizes = [2, 32], strides = [1, 1]} : vector<2x64xf32> to vector<2x32xf32>
    %c6_90 = arith.constant 6 : index
    %c32_91 = arith.constant 32 : index
    %335 = vector.load %arg6[%c6_90, %c32_91] : memref<16x64xf32, #tpu.memory_space<vmem>>, vector<2x32xf32>
    tpu.vector_store %arg6[%c6_90, %c32_91], %334 {strides = array<i32>} : memref<16x64xf32, #tpu.memory_space<vmem>>, vector<2x32xf32>,
    %336 = vector.extract_strided_slice %95 {offsets = [10, 0], sizes = [2, 256], strides = [1, 1]} : vector<16x256xf32> to vector<2x256xf32>
    %337 = vector.extract_strided_slice %95 {offsets = [4, 0], sizes = [2, 256], strides = [1, 1]} : vector<16x256xf32> to vector<2x256xf32>
    %338 = arith.select %118, %336, %337 : vector<2x256xi1>, vector<2x256xf32>
    %339 = arith.addf %338, %96 : vector<2x256xf32>
    %cst_92 = arith.constant dense<0.000000e+00> : vector<2x256xf32>
    %340 = tpu.matmul %326, %4, %cst_92 {dimension_numbers = #tpu.dot_dimension_numbers<[1], [0], [0], [1], [0, 0, 1, 1], [], []>} : vector<2x64xf32>, vector<64x256xf32>, vector<2x256xf32> -> vector<2x256xf32>
    %341 = arith.addf %339, %340 : vector<2x256xf32>
    %342 = vector.extract_strided_slice %341 {offsets = [0, 0], sizes = [2, 192], strides = [1, 1]} : vector<2x256xf32> to vector<2x192xf32>
    %343 = arith.negf %342 : vector<2x192xf32>
    %344 = math.exp %343 : vector<2x192xf32>
    %cst_93 = arith.constant 1.000000e+00 : f32
    %345 = vector.broadcast %cst_93 : f32 to vector<2x192xf32>
    %346 = arith.addf %345, %344 : vector<2x192xf32>
    %347 = arith.divf %345, %346 : vector<2x192xf32>
    %348 = vector.extract_strided_slice %341 {offsets = [0, 192], sizes = [2, 64], strides = [1, 1]} : vector<2x256xf32> to vector<2x64xf32>
    %349 = math.tanh %348 : vector<2x64xf32>
    %350 = vector.extract_strided_slice %347 {offsets = [0, 64], sizes = [2, 64], strides = [1, 1]} : vector<2x192xf32> to vector<2x64xf32>
    %351 = arith.mulf %350, %331 : vector<2x64xf32>
    %352 = vector.extract_strided_slice %347 {offsets = [0, 0], sizes = [2, 64], strides = [1, 1]} : vector<2x192xf32> to vector<2x64xf32>
    %353 = arith.mulf %352, %349 : vector<2x64xf32>
    %354 = arith.addf %351, %353 : vector<2x64xf32>
    %355 = vector.extract_strided_slice %347 {offsets = [0, 128], sizes = [2, 64], strides = [1, 1]} : vector<2x192xf32> to vector<2x64xf32>
    %356 = math.tanh %354 : vector<2x64xf32>
    %357 = arith.mulf %355, %356 : vector<2x64xf32>
    %358 = vector.extract_strided_slice %1 {offsets = [10, 0], sizes = [2, 1], strides = [1, 1]} : vector<16x1xf32> to vector<2x1xf32>
    %359 = vector.extract_strided_slice %1 {offsets = [4, 0], sizes = [2, 1], strides = [1, 1]} : vector<16x1xf32> to vector<2x1xf32>
    %360 = vector.shape_cast %358 : vector<2x1xf32> to vector<2x1xf32>
    %361 = vector.broadcast %360 : vector<2x1xf32> to vector<2x64xf32>
    %362 = vector.shape_cast %359 : vector<2x1xf32> to vector<2x1xf32>
    %363 = vector.broadcast %362 : vector<2x1xf32> to vector<2x64xf32>
    %364 = arith.select %99, %361, %363 : vector<2x64xi1>, vector<2x64xf32>
    %365 = arith.mulf %357, %364 : vector<2x64xf32>
    %cst_94 = arith.constant 1.000000e+00 : f32
    %366 = vector.broadcast %cst_94 : f32 to vector<2x64xf32>
    %367 = arith.subf %366, %364 : vector<2x64xf32>
    %368 = arith.mulf %367, %326 : vector<2x64xf32>
    %369 = arith.addf %365, %368 : vector<2x64xf32>
    %370 = arith.mulf %354, %364 : vector<2x64xf32>
    %cst_95 = arith.constant 1.000000e+00 : f32
    %371 = vector.broadcast %cst_95 : f32 to vector<2x64xf32>
    %372 = arith.subf %371, %364 : vector<2x64xf32>
    %373 = arith.mulf %372, %331 : vector<2x64xf32>
    %374 = arith.addf %370, %373 : vector<2x64xf32>
    %375 = vector.extract_strided_slice %365 {offsets = [0, 0], sizes = [2, 32], strides = [1, 1]} : vector<2x64xf32> to vector<2x32xf32>
    %c10_96 = arith.constant 10 : index
    %c0_97 = arith.constant 0 : index
    %376 = vector.load %arg6[%c10_96, %c0_97] : memref<16x64xf32, #tpu.memory_space<vmem>>, vector<2x32xf32>
    tpu.vector_store %arg6[%c10_96, %c0_97], %375 {strides = array<i32>} : memref<16x64xf32, #tpu.memory_space<vmem>>, vector<2x32xf32>,
    %377 = vector.extract_strided_slice %365 {offsets = [0, 32], sizes = [2, 32], strides = [1, 1]} : vector<2x64xf32> to vector<2x32xf32>
    %c4_98 = arith.constant 4 : index
    %c32_99 = arith.constant 32 : index
    %378 = vector.load %arg6[%c4_98, %c32_99] : memref<16x64xf32, #tpu.memory_space<vmem>>, vector<2x32xf32>
    tpu.vector_store %arg6[%c4_98, %c32_99], %377 {strides = array<i32>} : memref<16x64xf32, #tpu.memory_space<vmem>>, vector<2x32xf32>,
    %379 = vector.extract_strided_slice %95 {offsets = [12, 0], sizes = [2, 256], strides = [1, 1]} : vector<16x256xf32> to vector<2x256xf32>
    %380 = vector.extract_strided_slice %95 {offsets = [2, 0], sizes = [2, 256], strides = [1, 1]} : vector<16x256xf32> to vector<2x256xf32>
    %381 = arith.select %118, %379, %380 : vector<2x256xi1>, vector<2x256xf32>
    %382 = arith.addf %381, %96 : vector<2x256xf32>
    %cst_100 = arith.constant dense<0.000000e+00> : vector<2x256xf32>
    %383 = tpu.matmul %369, %4, %cst_100 {dimension_numbers = #tpu.dot_dimension_numbers<[1], [0], [0], [1], [0, 0, 1, 1], [], []>} : vector<2x64xf32>, vector<64x256xf32>, vector<2x256xf32> -> vector<2x256xf32>
    %384 = arith.addf %382, %383 : vector<2x256xf32>
    %385 = vector.extract_strided_slice %384 {offsets = [0, 0], sizes = [2, 192], strides = [1, 1]} : vector<2x256xf32> to vector<2x192xf32>
    %386 = arith.negf %385 : vector<2x192xf32>
    %387 = math.exp %386 : vector<2x192xf32>
    %cst_101 = arith.constant 1.000000e+00 : f32
    %388 = vector.broadcast %cst_101 : f32 to vector<2x192xf32>
    %389 = arith.addf %388, %387 : vector<2x192xf32>
    %390 = arith.divf %388, %389 : vector<2x192xf32>
    %391 = vector.extract_strided_slice %384 {offsets = [0, 192], sizes = [2, 64], strides = [1, 1]} : vector<2x256xf32> to vector<2x64xf32>
    %392 = math.tanh %391 : vector<2x64xf32>
    %393 = vector.extract_strided_slice %390 {offsets = [0, 64], sizes = [2, 64], strides = [1, 1]} : vector<2x192xf32> to vector<2x64xf32>
    %394 = arith.mulf %393, %374 : vector<2x64xf32>
    %395 = vector.extract_strided_slice %390 {offsets = [0, 0], sizes = [2, 64], strides = [1, 1]} : vector<2x192xf32> to vector<2x64xf32>
    %396 = arith.mulf %395, %392 : vector<2x64xf32>
    %397 = arith.addf %394, %396 : vector<2x64xf32>
    %398 = vector.extract_strided_slice %390 {offsets = [0, 128], sizes = [2, 64], strides = [1, 1]} : vector<2x192xf32> to vector<2x64xf32>
    %399 = math.tanh %397 : vector<2x64xf32>
    %400 = arith.mulf %398, %399 : vector<2x64xf32>
    %401 = vector.extract_strided_slice %1 {offsets = [12, 0], sizes = [2, 1], strides = [1, 1]} : vector<16x1xf32> to vector<2x1xf32>
    %402 = vector.extract_strided_slice %1 {offsets = [2, 0], sizes = [2, 1], strides = [1, 1]} : vector<16x1xf32> to vector<2x1xf32>
    %403 = vector.shape_cast %401 : vector<2x1xf32> to vector<2x1xf32>
    %404 = vector.broadcast %403 : vector<2x1xf32> to vector<2x64xf32>
    %405 = vector.shape_cast %402 : vector<2x1xf32> to vector<2x1xf32>
    %406 = vector.broadcast %405 : vector<2x1xf32> to vector<2x64xf32>
    %407 = arith.select %99, %404, %406 : vector<2x64xi1>, vector<2x64xf32>
    %408 = arith.mulf %400, %407 : vector<2x64xf32>
    %cst_102 = arith.constant 1.000000e+00 : f32
    %409 = vector.broadcast %cst_102 : f32 to vector<2x64xf32>
    %410 = arith.subf %409, %407 : vector<2x64xf32>
    %411 = arith.mulf %410, %369 : vector<2x64xf32>
    %412 = arith.addf %408, %411 : vector<2x64xf32>
    %413 = arith.mulf %397, %407 : vector<2x64xf32>
    %cst_103 = arith.constant 1.000000e+00 : f32
    %414 = vector.broadcast %cst_103 : f32 to vector<2x64xf32>
    %415 = arith.subf %414, %407 : vector<2x64xf32>
    %416 = arith.mulf %415, %374 : vector<2x64xf32>
    %417 = arith.addf %413, %416 : vector<2x64xf32>
    %418 = vector.extract_strided_slice %408 {offsets = [0, 0], sizes = [2, 32], strides = [1, 1]} : vector<2x64xf32> to vector<2x32xf32>
    %c12_104 = arith.constant 12 : index
    %c0_105 = arith.constant 0 : index
    %419 = vector.load %arg6[%c12_104, %c0_105] : memref<16x64xf32, #tpu.memory_space<vmem>>, vector<2x32xf32>
    tpu.vector_store %arg6[%c12_104, %c0_105], %418 {strides = array<i32>} : memref<16x64xf32, #tpu.memory_space<vmem>>, vector<2x32xf32>,
    %420 = vector.extract_strided_slice %408 {offsets = [0, 32], sizes = [2, 32], strides = [1, 1]} : vector<2x64xf32> to vector<2x32xf32>
    %c2_106 = arith.constant 2 : index
    %c32_107 = arith.constant 32 : index
    %421 = vector.load %arg6[%c2_106, %c32_107] : memref<16x64xf32, #tpu.memory_space<vmem>>, vector<2x32xf32>
    tpu.vector_store %arg6[%c2_106, %c32_107], %420 {strides = array<i32>} : memref<16x64xf32, #tpu.memory_space<vmem>>, vector<2x32xf32>,
    %422 = vector.extract_strided_slice %95 {offsets = [14, 0], sizes = [2, 256], strides = [1, 1]} : vector<16x256xf32> to vector<2x256xf32>
    %423 = vector.extract_strided_slice %95 {offsets = [0, 0], sizes = [2, 256], strides = [1, 1]} : vector<16x256xf32> to vector<2x256xf32>
    %424 = arith.select %118, %422, %423 : vector<2x256xi1>, vector<2x256xf32>
    %425 = arith.addf %424, %96 : vector<2x256xf32>
    %cst_108 = arith.constant dense<0.000000e+00> : vector<2x256xf32>
    %426 = tpu.matmul %412, %4, %cst_108 {dimension_numbers = #tpu.dot_dimension_numbers<[1], [0], [0], [1], [0, 0, 1, 1], [], []>} : vector<2x64xf32>, vector<64x256xf32>, vector<2x256xf32> -> vector<2x256xf32>
    %427 = arith.addf %425, %426 : vector<2x256xf32>
    %428 = vector.extract_strided_slice %427 {offsets = [0, 0], sizes = [2, 192], strides = [1, 1]} : vector<2x256xf32> to vector<2x192xf32>
    %429 = arith.negf %428 : vector<2x192xf32>
    %430 = math.exp %429 : vector<2x192xf32>
    %cst_109 = arith.constant 1.000000e+00 : f32
    %431 = vector.broadcast %cst_109 : f32 to vector<2x192xf32>
    %432 = arith.addf %431, %430 : vector<2x192xf32>
    %433 = arith.divf %431, %432 : vector<2x192xf32>
    %434 = vector.extract_strided_slice %427 {offsets = [0, 192], sizes = [2, 64], strides = [1, 1]} : vector<2x256xf32> to vector<2x64xf32>
    %435 = math.tanh %434 : vector<2x64xf32>
    %436 = vector.extract_strided_slice %433 {offsets = [0, 64], sizes = [2, 64], strides = [1, 1]} : vector<2x192xf32> to vector<2x64xf32>
    %437 = arith.mulf %436, %417 : vector<2x64xf32>
    %438 = vector.extract_strided_slice %433 {offsets = [0, 0], sizes = [2, 64], strides = [1, 1]} : vector<2x192xf32> to vector<2x64xf32>
    %439 = arith.mulf %438, %435 : vector<2x64xf32>
    %440 = arith.addf %437, %439 : vector<2x64xf32>
    %441 = vector.extract_strided_slice %433 {offsets = [0, 128], sizes = [2, 64], strides = [1, 1]} : vector<2x192xf32> to vector<2x64xf32>
    %442 = math.tanh %440 : vector<2x64xf32>
    %443 = arith.mulf %441, %442 : vector<2x64xf32>
    %444 = vector.extract_strided_slice %1 {offsets = [14, 0], sizes = [2, 1], strides = [1, 1]} : vector<16x1xf32> to vector<2x1xf32>
    %445 = vector.extract_strided_slice %1 {offsets = [0, 0], sizes = [2, 1], strides = [1, 1]} : vector<16x1xf32> to vector<2x1xf32>
    %446 = vector.shape_cast %444 : vector<2x1xf32> to vector<2x1xf32>
    %447 = vector.broadcast %446 : vector<2x1xf32> to vector<2x64xf32>
    %448 = vector.shape_cast %445 : vector<2x1xf32> to vector<2x1xf32>
    %449 = vector.broadcast %448 : vector<2x1xf32> to vector<2x64xf32>
    %450 = arith.select %99, %447, %449 : vector<2x64xi1>, vector<2x64xf32>
    %451 = arith.mulf %443, %450 : vector<2x64xf32>
    %452 = vector.extract_strided_slice %451 {offsets = [0, 0], sizes = [2, 32], strides = [1, 1]} : vector<2x64xf32> to vector<2x32xf32>
    %c14_110 = arith.constant 14 : index
    %c0_111 = arith.constant 0 : index
    %453 = vector.load %arg6[%c14_110, %c0_111] : memref<16x64xf32, #tpu.memory_space<vmem>>, vector<2x32xf32>
    tpu.vector_store %arg6[%c14_110, %c0_111], %452 {strides = array<i32>} : memref<16x64xf32, #tpu.memory_space<vmem>>, vector<2x32xf32>,
    %454 = vector.extract_strided_slice %451 {offsets = [0, 32], sizes = [2, 32], strides = [1, 1]} : vector<2x64xf32> to vector<2x32xf32>
    %c0_112 = arith.constant 0 : index
    %c32_113 = arith.constant 32 : index
    %455 = vector.load %arg6[%c0_112, %c32_113] : memref<16x64xf32, #tpu.memory_space<vmem>>, vector<2x32xf32>
    tpu.vector_store %arg6[%c0_112, %c32_113], %454 {strides = array<i32>} : memref<16x64xf32, #tpu.memory_space<vmem>>, vector<2x32xf32>,
    %c0_114 = arith.constant 0 : index
    %c0_115 = arith.constant 0 : index
    %456 = vector.load %arg6[%c0_114, %c0_115] : memref<16x64xf32, #tpu.memory_space<vmem>>, vector<16x64xf32>
    %cst_116 = arith.constant dense<0.000000e+00> : vector<16x64xf32>
    %457 = tpu.matmul %0, %8, %cst_116 {dimension_numbers = #tpu.dot_dimension_numbers<[1], [0], [0], [1], [0, 0, 1, 1], [], []>} : vector<16x32xf32>, vector<32x64xf32>, vector<16x64xf32> -> vector<16x64xf32>
    %458 = vector.broadcast %13 : vector<1x64xf32> to vector<16x64xf32>
    %459 = arith.addf %457, %458 : vector<16x64xf32>
    %460 = math.tanh %459 : vector<16x64xf32>
    %461 = vector.broadcast %1 : vector<16x1xf32> to vector<16x64xf32>
    %462 = arith.mulf %460, %461 : vector<16x64xf32>
    %cst_117 = arith.constant dense<0.000000e+00> : vector<16x128xf32>
    %463 = tpu.matmul %456, %9, %cst_117 {dimension_numbers = #tpu.dot_dimension_numbers<[1], [0], [0], [1], [0, 0, 1, 1], [], []>} : vector<16x64xf32>, vector<64x128xf32>, vector<16x128xf32> -> vector<16x128xf32>
    %cst_118 = arith.constant dense<0.000000e+00> : vector<16x128xf32>
    %464 = tpu.matmul %462, %10, %cst_118 {dimension_numbers = #tpu.dot_dimension_numbers<[1], [0], [0], [1], [0, 0, 1, 1], [], []>} : vector<16x64xf32>, vector<64x128xf32>, vector<16x128xf32> -> vector<16x128xf32>
    %465 = arith.addf %463, %464 : vector<16x128xf32>
    %466 = vector.broadcast %14 : vector<1x128xf32> to vector<16x128xf32>
    %467 = arith.addf %465, %466 : vector<16x128xf32>
    %c0_119 = arith.constant 0 : index
    %c0_120 = arith.constant 0 : index
    %468 = vector.load %arg4[%c0_119, %c0_120] : memref<16x128xf32, #tpu.memory_space<vmem>>, vector<16x128xf32>
    tpu.vector_store %arg4[%c0_119, %c0_120], %467 {strides = array<i32>} : memref<16x128xf32, #tpu.memory_space<vmem>>, vector<16x128xf32>,
    return
  }
  func.func @transform_0(%arg0: i32) -> (i32, i32) {
    %c0_i32 = arith.constant 0 : i32
    %c0_i32_0 = arith.constant 0 : i32
    %c0_i32_1 = arith.constant 0 : i32
    return %c0_i32, %c0_i32_0 : i32, i32
  }
  func.func @transform_1(%arg0: i32) -> (i32, i32) {
    %c0_i32 = arith.constant 0 : i32
    %c0_i32_0 = arith.constant 0 : i32
    %c0_i32_1 = arith.constant 0 : i32
    return %c0_i32, %c0_i32_0 : i32, i32
  }
  func.func @transform_2(%arg0: i32) -> (i32, i32) {
    %c0_i32 = arith.constant 0 : i32
    %c0_i32_0 = arith.constant 0 : i32
    %c0_i32_1 = arith.constant 0 : i32
    return %c0_i32, %c0_i32_0 : i32, i32
  }
  func.func @transform_3(%arg0: i32) -> (i32, i32) {
    %c0_i32 = arith.constant 0 : i32
    %c0_i32_0 = arith.constant 0 : i32
    %c0_i32_1 = arith.constant 0 : i32
    return %c0_i32, %c0_i32_0 : i32, i32
  }
}

</mosaic_0001>

<llo_original>
// kernel: word_sequence_forward.1
$region0: #{word_sequence_forward.1}
  #allocation0 [shape = 'u32[]', space=smem, size = 0x4, offset = 0x4, fixed_abs, tag = 'smem constant byte address 0x4 - core index']
  #allocation1 [shape = 'u32[72,128]{1,0:T(1,128)}', space=vmem, size = 0x9000, scoped, tag = 'internal scratch']
  #allocation2 [shape = 'f32[20,16]{1,0:T(8,128)}', space=vmem, size = 0x3000, scoped, tag = 'scratch operand']
  #allocation3 [shape = 'f32[16,64]{1,0:T(8,128)}', space=vmem, size = 0x2000, scoped, tag = 'scratch operand']
  %s0 = inlined_call_operand.vmem [shape: f32[16,32], index: 0, kind: input, shape index: {}]
  %s1 = inlined_call_operand.vmem [shape: f32[16,1], index: 1, kind: input, shape index: {}]
  %s2 = inlined_call_operand.hbm [shape: f32[416,256], index: 2, kind: input, shape index: {}]
  %s3 = inlined_call_operand.vmem [shape: f32[16,128], index: 3, kind: output, shape index: {}]
  %s4 = sld [smem:[#allocation0]]
  $region26: #{word_sequence_forward.1} parent=0
    _
  %s6 = ssub.s32 1, %s4
  %s7 = scalar_select 0, %s6, %s4
  $region1: #{word_sequence_forward.1} parent=0
    #allocation4 [shape = 'u8[425984]{0}', space=vmem, size = 0x68000, scoped, tag = 'input window, operand 2, single buffered']
    #allocation5 [shape = 's32[1]{0}', space=sflag, size = 0x4, scoped, tag = 'scoped memory for word_sequence_forward.1']
    %8 = vsyncpa [#allocation5], 0
    // Predicated region
    $region2: #{word_sequence_forward.1} parent=1 // pred_check
      _
    $region3: #{word_sequence_forward.1} parent=1 // pred_check_branch
      %10 = sbr.rel (0) target = $region5
    $region4: #{word_sequence_forward.1} parent=1 // pred_region
      _
    $region5: #{word_sequence_forward.1} parent=1 // pred_fallthru
      _
    // Predicated region
    $region6: #{word_sequence_forward.1} parent=1 // pred_check
      _
    $region7: #{word_sequence_forward.1} parent=1 // pred_check_branch
      %12 = sbr.rel (0) target = $region9
    $region8: #{word_sequence_forward.1} parent=1 // pred_region
      _
    $region9: #{word_sequence_forward.1} parent=1 // pred_fallthru
      _
    // Predicated region
    $region10: #{word_sequence_forward.1} parent=1 // pred_check
      _
    $region11: #{word_sequence_forward.1} parent=1 // pred_check_branch
      %14 = sbr.rel (0) target = $region13
    $region12: #{word_sequence_forward.1} parent=1 // pred_region
      %16 = vsyncadd [#allocation5], 0
      %s17 = sshll.u32 %s2, 4
      %s18 = int_to_ptr.hbm [resolvable:$true] %s17
      %s19 = sshll.u32 [#allocation4], 4
      %s20 = int_to_ptr.vmem [resolvable:$true] %s19
      %25 = dma.hbm_to_vmem [thread:$0]  %s18, 13312, %s20, [#allocation5], 256, 256, 16
    $region13: #{word_sequence_forward.1} parent=1 // pred_fallthru
      _
    // Predicated region
    $region14: #{word_sequence_forward.1} parent=1 // pred_check
      _
    $region15: #{word_sequence_forward.1} parent=1 // pred_check_branch
      %27 = sbr.rel (0) target = $region17
    $region16: #{word_sequence_forward.1} parent=1 // pred_region
      %29 = dma.done [#allocation5], 13312
    $region17: #{word_sequence_forward.1} parent=1 // pred_fallthru
      _
    %v30 = vld [vmem:[%s0] sm:$0xff]
    %v31 = vld [vmem:[%s0 + $0x8] sm:$0xff]
    %v32 = vld [vmem:[%s1] sm:$0xff]
    %v33 = vld [vmem:[%s1 + $0x8] sm:$0xff]
    %v34 = vld [vmem:[#allocation4] sm:$0xff]
    %v35 = vld [vmem:[#allocation4 + $0x8] sm:$0xff]
    %v36 = vld [vmem:[#allocation4 + $0x10] sm:$0xff]
    %v37 = vld [vmem:[#allocation4 + $0x18] sm:$0xff]
    %v38 = vld [vmem:[#allocation4 + $0x20] sm:$0xff]
    %v39 = vld [vmem:[#allocation4 + $0x28] sm:$0xff]
    %v40 = vld [vmem:[#allocation4 + $0x30] sm:$0xff]
    %v41 = vld [vmem:[#allocation4 + $0x38] sm:$0xff]
    %v42 = vld [vmem:[#allocation4 + $0x40] sm:$0xff]
    %v43 = vld [vmem:[#allocation4 + $0x48] sm:$0xff]
    %v44 = vld [vmem:[#allocation4 + $0x50] sm:$0xff]
    %v45 = vld [vmem:[#allocation4 + $0x58] sm:$0xff]
    %v46 = vld [vmem:[#allocation4 + $0x60] sm:$0xff]
    %v47 = vld [vmem:[#allocation4 + $0x68] sm:$0xff]
    %v48 = vld [vmem:[#allocation4 + $0x70] sm:$0xff]
    %v49 = vld [vmem:[#allocation4 + $0x78] sm:$0xff]
    %v50 = vld [vmem:[#allocation4 + $0x80] sm:$0xff]
    %v51 = vld [vmem:[#allocation4 + $0x88] sm:$0xff]
    %v52 = vld [vmem:[#allocation4 + $0x90] sm:$0xff]
    %v53 = vld [vmem:[#allocation4 + $0x98] sm:$0xff]
    %v54 = vld [vmem:[#allocation4 + $0xa0] sm:$0xff]
    %v55 = vld [vmem:[#allocation4 + $0xa8] sm:$0xff]
    %v56 = vld [vmem:[#allocation4 + $0xb0] sm:$0xff]
    %v57 = vld [vmem:[#allocation4 + $0xb8] sm:$0xff]
    %v58 = vld [vmem:[#allocation4 + $0xc0] sm:$0xff]
    %v59 = vld [vmem:[#allocation4 + $0xc8] sm:$0xff]
    %v60 = vld [vmem:[#allocation4 + $0xd0] sm:$0xff]
    %v61 = vld [vmem:[#allocation4 + $0xd8] sm:$0xff]
    %v62 = vld [vmem:[#allocation4 + $0xe0] sm:$0xff]
    %v63 = vld [vmem:[#allocation4 + $0xe8] sm:$0xff]
    %v64 = vld [vmem:[#allocation4 + $0xf0] sm:$0xff]
    %v65 = vld [vmem:[#allocation4 + $0xf8] sm:$0xff]
    %s66 = scalar_lea.vmem [#allocation4], 256
    %v67 = vld [vmem:[%s66] ss:$8 sm:$0x3]
    %v68 = vld [vmem:[#allocation4 + $0x110] sm:$0xff]
    %v69 = vld [vmem:[#allocation4 + $0x120] sm:$0xff]
    %v70 = vld [vmem:[#allocation4 + $0x130] sm:$0xff]
    %v71 = vld [vmem:[#allocation4 + $0x140] sm:$0xff]
    %v72 = vld [vmem:[#allocation4 + $0x150] sm:$0xff]
    %v73 = vld [vmem:[#allocation4 + $0x160] sm:$0xff]
    %v74 = vld [vmem:[#allocation4 + $0x170] sm:$0xff]
    %v75 = vld [vmem:[#allocation4 + $0x180] sm:$0xff]
    %v76 = vld [vmem:[#allocation4 + $0x1f0] sm:$0xff]
    %v77 = vld [vmem:[#allocation4 + $0x200] sm:$0xff]
    %v78 = vld [vmem:[#allocation4 + $0x210] sm:$0xff]
    %v79 = vld [vmem:[#allocation4 + $0x220] sm:$0xff]
    %v80 = vld [vmem:[#allocation4 + $0x230] sm:$0xff]
    %v81 = vld [vmem:[#allocation4 + $0x240] sm:$0xff]
    %v82 = vld [vmem:[#allocation4 + $0x250] sm:$0xff]
    %v83 = vld [vmem:[#allocation4 + $0x260] sm:$0xff]
    %v84 = vld [vmem:[#allocation4 + $0x270] sm:$0xff]
    %v85 = vld [vmem:[#allocation4 + $0x280] sm:$0xff]
    %v86 = vld [vmem:[#allocation4 + $0x290] sm:$0xff]
    %v87 = vld [vmem:[#allocation4 + $0x2a0] sm:$0xff]
    %v88 = vld [vmem:[#allocation4 + $0x2b0] sm:$0xff]
    %v89 = vld [vmem:[#allocation4 + $0x2c0] sm:$0xff]
    %v90 = vld [vmem:[#allocation4 + $0x2d0] sm:$0xff]
    %v91 = vld [vmem:[#allocation4 + $0x2e0] sm:$0xff]
    %v92 = vld [vmem:[#allocation4 + $0x2f0] sm:$0xff]
    %v93 = vld [vmem:[#allocation4 + $0x300] sm:$0xff]
    %v94 = vld [vmem:[#allocation4 + $0x310] sm:$0xff]
    %v95 = vld [vmem:[#allocation4 + $0x320] sm:$0xff]
    %v96 = vld [vmem:[#allocation4 + $0x330] ss:$0 sm:$0xff]
    %v97 = vld [vmem:[#allocation4 + $0x331] ss:$0 sm:$0xff]
    %v98 = vld [vmem:[#allocation4 + $0x332] ss:$0 sm:$0xff]
    %v99 = vld [vmem:[#allocation4 + $0x333] ss:$0 sm:$0xff]
    %v100 = vmul.f32 %v30, %v30
    %v101 = vmul.f32 %v31, %v31
    %vm102 = vcmask 261120
    %v103 = vsel %vm102, %v100, 0.0
    %104 = vadd.xlane.f32.xlu0 %v103
    %v105 = vpop.xlane.xlu0 %104
    %v106 = vsel %vm102, %v101, 0.0
    %107 = vadd.xlane.f32.xlu0 %v106
    %v108 = vpop.xlane.xlu0 %107
    %v109 = vrsqrt.pop %v105
    %v110 = vmul.f32 %v109, %v105
    %v111 = vmul.f32 %v110, %v109
    %v112 = vmul.f32 0.5, %v111
    %v113 = vsub.f32 1.5, %v112
    %v114 = vmul.f32 %v109, %v113
    %v115 = vmul.f32 %v105, %v114
    %vm116 = vcmp.eq.f32.partialorder %v105, inf
    %v117 = vsel %vm116, %v105, %v115
    %vm118 = vcmp.eq.f32.partialorder %v105, 0.0
    %v119 = vand.u32 %v105, 2147483648
    %v120 = vsel %vm118, %v119, %v117
    %v121 = vrsqrt.pop %v108
    %v122 = vmul.f32 %v121, %v108
    %v123 = vmul.f32 %v122, %v121
    %v124 = vmul.f32 0.5, %v123
    %v125 = vsub.f32 1.5, %v124
    %v126 = vmul.f32 %v121, %v125
    %v127 = vmul.f32 %v108, %v126
    %vm128 = vcmp.eq.f32.partialorder %v108, inf
    %v129 = vsel %vm128, %v108, %v127
    %vm130 = vcmp.eq.f32.partialorder %v108, 0.0
    %v131 = vand.u32 %v108, 2147483648
    %v132 = vsel %vm130, %v131, %v129
    %v133 = vadd.f32 %v120, 1e-08
    %v134 = vadd.f32 %v132, 1e-08
    %v135 = vrcp.pop %v133
    %v136 = vmul.f32 %v133, %v135
    %v137 = vsub.f32 1.0, %v136
    %v138 = vmul.f32 %v135, %v137
    %v139 = vadd.f32 %v135, %v138
    %vm140 = vweird.f32 %v133
    %vm141 = vweird.f32 %v135
    %vm142 = vmor %vm140, %vm141
    %v143 = vsel %vm142, %v135, %v139
    %v144 = vand.u32 2147483647, %v133
    %vm145 = vcmp.eq.f32.partialorder %v144, 8.507059e+37
    %v146 = vand.u32 %v133, 2147483648
    %v147 = vor.u32 1.1754944e-38, %v146
    %v148 = vsel %vm145, %v147, %v143
    %v149 = vmul.f32 %v30, %v148
    %v150 = vrcp.pop %v134
    %v151 = vmul.f32 %v134, %v150
    %v152 = vsub.f32 1.0, %v151
    %v153 = vmul.f32 %v150, %v152
    %v154 = vadd.f32 %v150, %v153
    %vm155 = vweird.f32 %v134
    %vm156 = vweird.f32 %v150
    %vm157 = vmor %vm155, %vm156
    %v158 = vsel %vm157, %v150, %v154
    %v159 = vand.u32 2147483647, %v134
    %vm160 = vcmp.eq.f32.partialorder %v159, 8.507059e+37
    %v161 = vand.u32 %v134, 2147483648
    %v162 = vor.u32 1.1754944e-38, %v161
    %v163 = vsel %vm160, %v162, %v158
    %v164 = vmul.f32 %v31, %v163
    %v166 = vsel %vm102, %v149, 0
    %v169 = vsel %vm102, %v164, 0
    %171 = vmatpush.msra.mxu0 0.0
    %172 = vmatpush.msra.mxu0 0.0
    %173 = vmatpush.msra.mxu0 0.0
    %174 = vmatpush.msra.mxu0 0.0
    %175 = vmatpush.msra.mxu0 0.0
    %176 = vmatpush.msra.mxu0 0.0
    %177 = vmatpush.msra.mxu0 0.0
    %178 = vmatpush.msra.mxu0 0.0
    %179 = vmatpush.msra.mxu0 0.0
    %180 = vmatpush.msra.mxu0 0.0
    %181 = vmatpush.msra.mxu0 0.0
    %182 = vmatpush.msra.mxu0 0.0
    %183 = vmatpush.msra.mxu0 %v71
    %184 = vmatpush.msra.mxu0 %v70
    %185 = vmatpush.msra.mxu0 %v69
    %186 = vmatpush.msra.mxu0 %v68
    %187 = vmatmul.f32.gmra.mxu0 %v166
    %v188 = vpop.f32.mrf.mxu0
    %v189 = vadd.f32 0.0, %v188
    %190 = vmatmul.f32.gmra.mxu0 %v169
    %v191 = vpop.f32.mrf.mxu0
    %v192 = vadd.f32 0.0, %v191
    %193 = vdwg.mxu0
    %v195 = vsel %vm102, %v30, 0
    %v198 = vsel %vm102, %v31, 0
    %200 = vmatpush.msra.mxu0 0.0
    %201 = vmatpush.msra.mxu0 0.0
    %202 = vmatpush.msra.mxu0 0.0
    %203 = vmatpush.msra.mxu0 0.0
    %204 = vmatpush.msra.mxu0 0.0
    %205 = vmatpush.msra.mxu0 0.0
    %206 = vmatpush.msra.mxu0 0.0
    %207 = vmatpush.msra.mxu0 0.0
    %208 = vmatpush.msra.mxu0 0.0
    %209 = vmatpush.msra.mxu0 0.0
    %210 = vmatpush.msra.mxu0 0.0
    %211 = vmatpush.msra.mxu0 0.0
    %212 = vmatpush.msra.mxu0 %v75
    %213 = vmatpush.msra.mxu0 %v74
    %214 = vmatpush.msra.mxu0 %v73
    %215 = vmatpush.msra.mxu0 %v72
    %216 = vmatmul.f32.gmra.mxu0 %v195
    %v217 = vpop.f32.mrf.mxu0
    %v218 = vadd.f32 %v96, %v217
    %219 = vmatmul.f32.gmra.mxu0 %v198
    %v220 = vpop.f32.mrf.mxu0
    %v221 = vadd.f32 %v96, %v220
    %222 = vdwg.mxu0
    %v223 = vtanh.pop %v218
    %v224 = vtanh.pop %v221
    %vm225 = vcmask 123904
    %226 = vst.msk [vmem:[#allocation2] sm:$0x3] %vm225, 0.0
    %227 = vst.msk [vmem:[#allocation2 + $0x12] sm:$0x3] %vm225, 0.0
    %vm228 = vcmask 130048
    %229 = vst.msk [vmem:[#allocation2 + $0x2] sm:$0xff] %vm228, %v189
    %230 = vst.msk [vmem:[#allocation2 + $0xa] sm:$0xff] %vm228, %v192
    %v231 = vld [vmem:[#allocation2] sm:$0xff]
    %v232 = vld [vmem:[#allocation2 + $0x8] sm:$0xff]
    %v233 = vld [vmem:[#allocation2 + $0x4] sm:$0xff]
    %v234 = vld [vmem:[#allocation2 + $0xc] sm:$0xff]
    %v235 = vld [vmem:[#allocation4 + $0x190] sm:$0xff]
    %v236 = vld [vmem:[#allocation4 + $0x1a0] sm:$0xff]
    %v237 = vld [vmem:[#allocation4 + $0x1b0] sm:$0xff]
    %v238 = vld [vmem:[#allocation4 + $0x1c0] sm:$0xff]
    %v240 = vsel %vm228, %v189, 0
    %v243 = vsel %vm228, %v192, 0
    %245 = vmatpush.msra.mxu0 0.0
    %246 = vmatpush.msra.mxu0 0.0
    %247 = vmatpush.msra.mxu0 0.0
    %248 = vmatpush.msra.mxu0 0.0
    %249 = vmatpush.msra.mxu0 0.0
    %250 = vmatpush.msra.mxu0 0.0
    %251 = vmatpush.msra.mxu0 0.0
    %252 = vmatpush.msra.mxu0 0.0
    %253 = vmatpush.msra.mxu0 0.0
    %254 = vmatpush.msra.mxu0 0.0
    %255 = vmatpush.msra.mxu0 0.0
    %256 = vmatpush.msra.mxu0 0.0
    %257 = vmatpush.msra.mxu0 0.0
    %258 = vmatpush.msra.mxu0 0.0
    %259 = vmatpush.msra.mxu0 %v238
    %260 = vmatpush.msra.mxu0 %v237
    %261 = vmatmul.f32.gmra.mxu0 %v240
    %v262 = vpop.f32.mrf.mxu0
    %v263 = vadd.f32 0.0, %v262
    %264 = vmatmul.f32.gmra.mxu0 %v243
    %v265 = vpop.f32.mrf.mxu0
    %v266 = vadd.f32 0.0, %v265
    %267 = vdwg.mxu0
    %v269 = vsel %vm228, %v231, 0
    %v272 = vsel %vm228, %v232, 0
    %274 = vmatpush.msra.mxu0 0.0
    %275 = vmatpush.msra.mxu0 0.0
    %276 = vmatpush.msra.mxu0 0.0
    %277 = vmatpush.msra.mxu0 0.0
    %278 = vmatpush.msra.mxu0 0.0
    %279 = vmatpush.msra.mxu0 0.0
    %280 = vmatpush.msra.mxu0 0.0
    %281 = vmatpush.msra.mxu0 0.0
    %282 = vmatpush.msra.mxu0 0.0
    %283 = vmatpush.msra.mxu0 0.0
    %284 = vmatpush.msra.mxu0 0.0
    %285 = vmatpush.msra.mxu0 0.0
    %286 = vmatpush.msra.mxu0 0.0
    %287 = vmatpush.msra.mxu0 0.0
    %288 = vmatpush.msra.mxu0 %v236
    %289 = vmatpush.msra.mxu0 %v235
    %290 = vmatmul.f32.gmra.mxu0 %v269
    %v291 = vpop.f32.mrf.mxu0
    %v292 = vadd.f32 %v263, %v291
    %293 = vmatmul.f32.gmra.mxu0 %v272
    %v294 = vpop.f32.mrf.mxu0
    %v295 = vadd.f32 %v266, %v294
    %296 = vdwg.mxu0
    %v297 = vld [vmem:[#allocation4 + $0x1d0] sm:$0xff]
    %v298 = vld [vmem:[#allocation4 + $0x1e0] sm:$0xff]
    %v300 = vsel %vm228, %v233, 0
    %v303 = vsel %vm228, %v234, 0
    %305 = vmatpush.msra.mxu0 0.0
    %306 = vmatpush.msra.mxu0 0.0
    %307 = vmatpush.msra.mxu0 0.0
    %308 = vmatpush.msra.mxu0 0.0
    %309 = vmatpush.msra.mxu0 0.0
    %310 = vmatpush.msra.mxu0 0.0
    %311 = vmatpush.msra.mxu0 0.0
    %312 = vmatpush.msra.mxu0 0.0
    %313 = vmatpush.msra.mxu0 0.0
    %314 = vmatpush.msra.mxu0 0.0
    %315 = vmatpush.msra.mxu0 0.0
    %316 = vmatpush.msra.mxu0 0.0
    %317 = vmatpush.msra.mxu0 0.0
    %318 = vmatpush.msra.mxu0 0.0
    %319 = vmatpush.msra.mxu0 %v298
    %320 = vmatpush.msra.mxu0 %v297
    %321 = vmatmul.f32.gmra.mxu0 %v300
    %v322 = vpop.f32.mrf.mxu0
    %v323 = vadd.f32 0.0, %v322
    %324 = vmatmul.f32.gmra.mxu0 %v303
    %v325 = vpop.f32.mrf.mxu0
    %v326 = vadd.f32 0.0, %v325
    %327 = vdwg.mxu0
    %v328 = vadd.f32 %v292, %v323
    %v329 = vadd.f32 %v295, %v326
    %v330 = vadd.f32 %v328, %v97
    %v331 = vadd.f32 %v329, %v97
    %v332 = vmax.f32 %v330, 0.0
    %v333 = vmax.f32 %v331, 0.0
    %v334 = vsel %vm228, %v332, -inf
    %335 = vmax.xlane.f32.xlu0 %v334
    %v336 = vpop.xlane.xlu0 %335
    %v337 = vsel %vm228, %v333, -inf
    %338 = vmax.xlane.f32.xlu0 %v337
    %v339 = vpop.xlane.xlu0 %338
    %vm340 = vcmp.gt.f32.partialorder %v32, 0.0
    %vm341 = vcmp.gt.f32.partialorder %v33, 0.0
    %v342 = vsel %vm340, %v336, -1e+30
    %v343 = vsel %vm341, %v339, -1e+30
    %vm344 = vcmask 7168
    %v345 = vsel %vm344, %v342, -inf
    %v346 = vsel %vm344, %v343, -inf
    %v347 = vmax.f32 %v345, %v346
    %v348 = vrot.slane %v347, 4
    %v349 = vmax.f32 %v347, %v348
    %v350 = vrot.slane %v349, 2
    %v351 = vmax.f32 %v349, %v350
    %v352 = vrot.slane %v351, 1
    %v353 = vmax.f32 %v351, %v352
    %v354 = vsub.f32 %v336, %v353
    %v355 = vsub.f32 %v339, %v353
    %v356 = vmul.f32 %v354, 1.442695
    %v357 = vpow.pop %v356
    %v358 = vmul.f32 %v355, 1.442695
    %v359 = vpow.pop %v358
    %v360 = vsel %vm340, %v357, 0.0
    %v361 = vsel %vm341, %v359, 0.0
    %v362 = vlaneseq
    %v363 = vand.u32 %v362, 127
    %v364 = vlaneseq
    %v365 = vshrl.u32 %v364, 7
    %vm366 = vcmp.lt.s32.totalorder %v363, 0
    %v367 = vsub.s32 0, %v363
    %v368 = vsel %vm366, %v367, %v363
    %v369 = vshrl.u32 %v368, 1
    %v370 = vand.u32 %v368, 1
    %v371 = vsub.s32 0, %v370
    %v372 = vsel %vm366, %v371, %v370
    %vm373 = vcmp.ne.s32.totalorder %v372, 0
    %vm374 = vcmp.lt.s32.totalorder %v372, 0
    %vm375 = vmand %vm374, %vm373
    %v376 = vadd.s32 %v372, 2
    %v377 = vsel %vm375, %v376, %v372
    %vm378 = vcmp.eq.s32.totalorder %v377, %v365
    %v379 = vsel %vm378, 1, 0
    %v380 = vcvt.s32.f32 %v379
    %382 = vset.pattern.permute.xlu0 0
    %383 = vperm.xlu0 %382, %v360
    %v384 = vpop.permute.xlu0 %383
    %387 = vset.pattern.permute.xlu0 0
    %388 = vperm.xlu0 %387, %v361
    %v389 = vpop.permute.xlu0 %388
    %v391 = vmul.f32 %v384, %v223
    %v392 = vmul.f32 %v389, %v224
    %393 = vrot.lane.b32.xlu0 %v360, 32
    %v394 = vpop.permute.xlu0 %393
    %395 = vrot.lane.b32.xlu0 %v361, 32
    %v396 = vpop.permute.xlu0 %395
    %v399 = vsel %vm102, %v391, %v394
    %v400 = vsel %vm102, %v392, %v396
    %v402 = vsel %vm228, %v380, 0
    %404 = vmatpush.msra.mxu0 0.0
    %405 = vmatpush.msra.mxu0 0.0
    %406 = vmatpush.msra.mxu0 0.0
    %407 = vmatpush.msra.mxu0 0.0
    %408 = vmatpush.msra.mxu0 0.0
    %409 = vmatpush.msra.mxu0 0.0
    %410 = vmatpush.msra.mxu0 0.0
    %411 = vmatpush.msra.mxu0 0.0
    %412 = vmatpush.msra.mxu0 0.0
    %413 = vmatpush.msra.mxu0 0.0
    %414 = vmatpush.msra.mxu0 0.0
    %415 = vmatpush.msra.mxu0 0.0
    %416 = vmatpush.msra.mxu0 0.0
    %417 = vmatpush.msra.mxu0 0.0
    %418 = vmatpush.msra.mxu0 %v400
    %419 = vmatpush.msra.mxu0 %v399
    %420 = vmatmul.f32.gmra.mxu0 %v402
    %v421 = vpop.f32.mrf.mxu0
    %v422 = vadd.f32 0.0, %v421
    %423 = vdwg.mxu0
    %vm424 = vcmp.gt.f32.partialorder %v422, 0.0
    %v425 = vsel %vm424, %v422, 1.0
    %427 = vset.pattern.permute.xlu0 32
    %428 = vperm.xlu0 %427, %v425
    %v429 = vpop.permute.xlu0 %428
    %v431 = vrcp.pop %v429
    %v432 = vmul.f32 %v429, %v431
    %v433 = vsub.f32 1.0, %v432
    %v434 = vmul.f32 %v431, %v433
    %v435 = vadd.f32 %v431, %v434
    %vm436 = vweird.f32 %v429
    %vm437 = vweird.f32 %v431
    %vm438 = vmor %vm436, %vm437
    %v439 = vsel %vm438, %v431, %v435
    %v440 = vand.u32 2147483647, %v429
    %vm441 = vcmp.eq.f32.partialorder %v440, 8.507059e+37
    %v442 = vand.u32 %v429, 2147483648
    %v443 = vor.u32 1.1754944e-38, %v442
    %v444 = vsel %vm441, %v443, %v439
    %v445 = vmul.f32 %v422, %v444
    %v447 = vperm.slane %v67, 0
    %v448 = vperm.slane %v67, 1
    %451 = vmatpush.msra.mxu0 0.0
    %452 = vmatpush.msra.mxu0 0.0
    %453 = vmatpush.msra.mxu0 0.0
    %454 = vmatpush.msra.mxu0 0.0
    %455 = vmatpush.msra.mxu0 0.0
    %456 = vmatpush.msra.mxu0 0.0
    %457 = vmatpush.msra.mxu0 0.0
    %458 = vmatpush.msra.mxu0 0.0
    %459 = vmatpush.msra.mxu0 0.0
    %460 = vmatpush.msra.mxu0 0.0
    %461 = vmatpush.msra.mxu0 0.0
    %462 = vmatpush.msra.mxu0 0.0
    %463 = vmatpush.msra.mxu0 %v40
    %464 = vmatpush.msra.mxu0 %v38
    %465 = vmatpush.msra.mxu0 %v36
    %466 = vmatpush.msra.mxu0 %v34
    %467 = vmatmul.f32.gmra.mxu0 %v195
    %v468 = vpop.f32.mrf.mxu0
    %v469 = vadd.f32 %v447, %v468
    %470 = vmatmul.f32.gmra.mxu0 %v198
    %v471 = vpop.f32.mrf.mxu0
    %v472 = vadd.f32 %v447, %v471
    %473 = vdwg.mxu0
    %474 = vmatpush.msra.mxu0 0.0
    %475 = vmatpush.msra.mxu0 0.0
    %476 = vmatpush.msra.mxu0 0.0
    %477 = vmatpush.msra.mxu0 0.0
    %478 = vmatpush.msra.mxu0 0.0
    %479 = vmatpush.msra.mxu0 0.0
    %480 = vmatpush.msra.mxu0 0.0
    %481 = vmatpush.msra.mxu0 0.0
    %482 = vmatpush.msra.mxu0 0.0
    %483 = vmatpush.msra.mxu0 0.0
    %484 = vmatpush.msra.mxu0 0.0
    %485 = vmatpush.msra.mxu0 0.0
    %486 = vmatpush.msra.mxu0 %v41
    %487 = vmatpush.msra.mxu0 %v39
    %488 = vmatpush.msra.mxu0 %v37
    %489 = vmatpush.msra.mxu0 %v35
    %490 = vmatmul.f32.gmra.mxu0 %v195
    %v491 = vpop.f32.mrf.mxu0
    %v492 = vadd.f32 %v448, %v491
    %493 = vmatmul.f32.gmra.mxu0 %v198
    %v494 = vpop.f32.mrf.mxu0
    %v495 = vadd.f32 %v448, %v494
    %496 = vdwg.mxu0
    %v498 = vsel %vm102, %v445, 0
    %500 = vmatpush.msra.mxu0 0.0
    %501 = vmatpush.msra.mxu0 0.0
    %502 = vmatpush.msra.mxu0 0.0
    %503 = vmatpush.msra.mxu0 0.0
    %504 = vmatpush.msra.mxu0 0.0
    %505 = vmatpush.msra.mxu0 0.0
    %506 = vmatpush.msra.mxu0 0.0
    %507 = vmatpush.msra.mxu0 0.0
    %508 = vmatpush.msra.mxu0 0.0
    %509 = vmatpush.msra.mxu0 0.0
    %510 = vmatpush.msra.mxu0 0.0
    %511 = vmatpush.msra.mxu0 0.0
    %512 = vmatpush.msra.mxu0 %v48
    %513 = vmatpush.msra.mxu0 %v46
    %514 = vmatpush.msra.mxu0 %v44
    %515 = vmatpush.msra.mxu0 %v42
    %516 = vmatmul.f32.gmra.mxu0 %v498
    %v517 = vpop.f32.mrf.mxu0
    %v518 = vadd.f32 0.0, %v517
    %519 = vdwg.mxu0
    %520 = vmatpush.msra.mxu0 0.0
    %521 = vmatpush.msra.mxu0 0.0
    %522 = vmatpush.msra.mxu0 0.0
    %523 = vmatpush.msra.mxu0 0.0
    %524 = vmatpush.msra.mxu0 0.0
    %525 = vmatpush.msra.mxu0 0.0
    %526 = vmatpush.msra.mxu0 0.0
    %527 = vmatpush.msra.mxu0 0.0
    %528 = vmatpush.msra.mxu0 0.0
    %529 = vmatpush.msra.mxu0 0.0
    %530 = vmatpush.msra.mxu0 0.0
    %531 = vmatpush.msra.mxu0 0.0
    %532 = vmatpush.msra.mxu0 %v49
    %533 = vmatpush.msra.mxu0 %v47
    %534 = vmatpush.msra.mxu0 %v45
    %535 = vmatpush.msra.mxu0 %v43
    %536 = vmatmul.f32.gmra.mxu0 %v498
    %v537 = vpop.f32.mrf.mxu0
    %v538 = vadd.f32 0.0, %v537
    %539 = vdwg.mxu0
    %vm540 = vcmp.lt.s32.totalorder %v363, 32
    %v541 = vadd.s32 %v363, 128
    %vm542 = vcmp.lt.s32.totalorder %v363, 0
    %v543 = vsub.s32 0, %v363
    %v544 = vsel %vm542, %v543, %v363
    %v545 = vshrl.u32 %v544, 6
    %v546 = vand.u32 %v544, 63
    %v547 = vsub.s32 0, %v546
    %v548 = vsel %vm542, %v547, %v546
    %vm549 = vcmp.lt.s32.totalorder %v541, 0
    %v550 = vsub.s32 0, %v541
    %v551 = vsel %vm549, %v550, %v541
    %v552 = vshrl.u32 %v551, 6
    %v553 = vand.u32 %v551, 63
    %v554 = vsub.s32 0, %v553
    %v555 = vsel %vm549, %v554, %v553
    %vm556 = vcmp.ne.s32.totalorder %v548, 0
    %vm557 = vcmp.ne.s32.totalorder %v555, 0
    %vm558 = vcmp.lt.s32.totalorder %v548, 0
    %vm559 = vcmp.lt.s32.totalorder %v555, 0
    %vm560 = vmand %vm558, %vm556
    %vm561 = vmand %vm559, %vm557
    %v562 = vadd.s32 %v548, 64
    %v563 = vadd.s32 %v555, 64
    %v564 = vsel %vm560, %v562, %v548
    %v565 = vsel %vm561, %v563, %v555
    %vm566 = vcmp.lt.s32.totalorder %v564, 32
    %vm567 = vcmp.lt.s32.totalorder %v565, 32
    %v570 = vrot.slane %v472, 6
    %v571 = vrot.slane %v495, 6
    %v574 = vsel %vm566, %v469, %v570
    %v575 = vsel %vm567, %v492, %v571
    %v576 = vadd.f32 %v574, %v518
    %v577 = vadd.f32 %v575, %v538
    %vm578 = vcmask 523264
    %v580 = vsel %vm578, 0.0, 0
    %582 = vmatpush.msra.mxu0 0.0
    %583 = vmatpush.msra.mxu0 0.0
    %584 = vmatpush.msra.mxu0 0.0
    %585 = vmatpush.msra.mxu0 0.0
    %586 = vmatpush.msra.mxu0 0.0
    %587 = vmatpush.msra.mxu0 0.0
    %588 = vmatpush.msra.mxu0 0.0
    %589 = vmatpush.msra.mxu0 0.0
    %590 = vmatpush.msra.mxu0 %v64
    %591 = vmatpush.msra.mxu0 %v62
    %592 = vmatpush.msra.mxu0 %v60
    %593 = vmatpush.msra.mxu0 %v58
    %594 = vmatpush.msra.mxu0 %v56
    %595 = vmatpush.msra.mxu0 %v54
    %596 = vmatpush.msra.mxu0 %v52
    %597 = vmatpush.msra.mxu0 %v50
    %598 = vmatmul.f32.gmra.mxu0 %v580
    %v599 = vpop.f32.mrf.mxu0
    %v600 = vadd.f32 0.0, %v599
    %601 = vdwg.mxu0
    %602 = vmatpush.msra.mxu0 0.0
    %603 = vmatpush.msra.mxu0 0.0
    %604 = vmatpush.msra.mxu0 0.0
    %605 = vmatpush.msra.mxu0 0.0
    %606 = vmatpush.msra.mxu0 0.0
    %607 = vmatpush.msra.mxu0 0.0
    %608 = vmatpush.msra.mxu0 0.0
    %609 = vmatpush.msra.mxu0 0.0
    %610 = vmatpush.msra.mxu0 %v65
    %611 = vmatpush.msra.mxu0 %v63
    %612 = vmatpush.msra.mxu0 %v61
    %613 = vmatpush.msra.mxu0 %v59
    %614 = vmatpush.msra.mxu0 %v57
    %615 = vmatpush.msra.mxu0 %v55
    %616 = vmatpush.msra.mxu0 %v53
    %617 = vmatpush.msra.mxu0 %v51
    %618 = vmatmul.f32.gmra.mxu0 %v580
    %v619 = vpop.f32.mrf.mxu0
    %v620 = vadd.f32 0.0, %v619
    %621 = vdwg.mxu0
    %v622 = vadd.f32 %v576, %v600
    %v623 = vadd.f32 %v577, %v620
    %v624 = vxor.u32 %v622, 2147483648
    %v625 = vxor.u32 %v623, 2147483648
    %v626 = vmul.f32 %v624, 1.442695
    %v627 = vpow.pop %v626
    %v628 = vmul.f32 %v625, 1.442695
    %v629 = vpow.pop %v628
    %v630 = vadd.f32 %v627, 1.0
    %v631 = vadd.f32 %v629, 1.0
    %v632 = vrcp.pop %v630
    %v633 = vmul.f32 %v630, %v632
    %v634 = vsub.f32 1.0, %v633
    %v635 = vmul.f32 %v632, %v634
    %v636 = vadd.f32 %v632, %v635
    %vm637 = vweird.f32 %v630
    %vm638 = vweird.f32 %v632
    %vm639 = vmor %vm637, %vm638
    %v640 = vsel %vm639, %v632, %v636
    %v641 = vand.u32 2147483647, %v630
    %vm642 = vcmp.eq.f32.partialorder %v641, 8.507059e+37
    %v643 = vand.u32 %v630, 2147483648
    %v644 = vor.u32 1.1754944e-38, %v643
    %v645 = vsel %vm642, %v644, %v640
    %v646 = vmul.f32 1.0, %v645
    %v647 = vrcp.pop %v631
    %v648 = vmul.f32 %v631, %v647
    %v649 = vsub.f32 1.0, %v648
    %v650 = vmul.f32 %v647, %v649
    %v651 = vadd.f32 %v647, %v650
    %vm652 = vweird.f32 %v631
    %vm653 = vweird.f32 %v647
    %vm654 = vmor %vm652, %vm653
    %v655 = vsel %vm654, %v647, %v651
    %v656 = vand.u32 2147483647, %v631
    %vm657 = vcmp.eq.f32.partialorder %v656, 8.507059e+37
    %v658 = vand.u32 %v631, 2147483648
    %v659 = vor.u32 1.1754944e-38, %v658
    %v660 = vsel %vm657, %v659, %v655
    %v661 = vmul.f32 1.0, %v660
    %v662 = vtanh.pop %v623
    %v663 = vmul.f32 %v646, 0.0
    %665 = vrot.lane.b32.xlu0 %v662, 64
    %v666 = vpop.permute.xlu0 %665
    %v668 = vmul.f32 %v646, %v666
    %670 = vrot.lane.b32.xlu0 %v668, 64
    %v671 = vpop.permute.xlu0 %670
    %v673 = vadd.f32 %v663, %v671
    %v674 = vtanh.pop %v673
    %676 = vrot.lane.b32.xlu0 %v674, 64
    %v677 = vpop.permute.xlu0 %676
    %v679 = vmul.f32 %v661, %v677
    %681 = vset.pattern.permute.xlu0 0
    %682 = vperm.xlu0 %681, %v32
    %v683 = vpop.permute.xlu0 %682
    %686 = vset.pattern.permute.xlu0 0
    %687 = vperm.xlu0 %686, %v33
    %v688 = vpop.permute.xlu0 %687
    %v690 = vrot.slane %v688, 6
    %v692 = vsel %vm540, %v683, %v690
    %v693 = vmul.f32 %v679, %v692
    %v694 = vsub.f32 1.0, %v692
    %v695 = vmul.f32 %v694, 0.0
    %v696 = vadd.f32 %v693, %v695
    %698 = vrot.lane.b32.xlu0 %v692, 64
    %v699 = vpop.permute.xlu0 %698
    %v701 = vmul.f32 %v673, %v699
    %703 = vrot.lane.b32.xlu0 %v695, 64
    %v704 = vpop.permute.xlu0 %703
    %v706 = vadd.f32 %v701, %v704
    %vm707 = vcmask 254976
    %708 = vst.msk [vmem:[#allocation3] sm:$0x3] %vm707, %v693
    %vm709 = vcmask 517376
    %710 = vst.msk [vmem:[#allocation3 + $0xe] sm:$0x3] %vm709, %v693
    %v711 = vrot.slane %v472, 2
    %v712 = vrot.slane %v495, 2
    %v715 = vsel %vm566, %v469, %v711
    %v716 = vsel %vm567, %v492, %v712
    %v719 = vrot.slane %v518, 6
    %v720 = vrot.slane %v538, 6
    %v723 = vadd.f32 %v715, %v719
    %v724 = vadd.f32 %v716, %v720
    %v726 = vsel %vm578, %v696, 0
    %728 = vmatpush.msra.mxu0 0.0
    %729 = vmatpush.msra.mxu0 0.0
    %730 = vmatpush.msra.mxu0 0.0
    %731 = vmatpush.msra.mxu0 0.0
    %732 = vmatpush.msra.mxu0 0.0
    %733 = vmatpush.msra.mxu0 0.0
    %734 = vmatpush.msra.mxu0 0.0
    %735 = vmatpush.msra.mxu0 0.0
    %736 = vmatpush.msra.mxu0 %v64
    %737 = vmatpush.msra.mxu0 %v62
    %738 = vmatpush.msra.mxu0 %v60
    %739 = vmatpush.msra.mxu0 %v58
    %740 = vmatpush.msra.mxu0 %v56
    %741 = vmatpush.msra.mxu0 %v54
    %742 = vmatpush.msra.mxu0 %v52
    %743 = vmatpush.msra.mxu0 %v50
    %744 = vmatmul.f32.gmra.mxu0 %v726
    %v745 = vpop.f32.mrf.mxu0
    %v746 = vadd.f32 0.0, %v745
    %747 = vdwg.mxu0
    %748 = vmatpush.msra.mxu0 0.0
    %749 = vmatpush.msra.mxu0 0.0
    %750 = vmatpush.msra.mxu0 0.0
    %751 = vmatpush.msra.mxu0 0.0
    %752 = vmatpush.msra.mxu0 0.0
    %753 = vmatpush.msra.mxu0 0.0
    %754 = vmatpush.msra.mxu0 0.0
    %755 = vmatpush.msra.mxu0 0.0
    %756 = vmatpush.msra.mxu0 %v65
    %757 = vmatpush.msra.mxu0 %v63
    %758 = vmatpush.msra.mxu0 %v61
    %759 = vmatpush.msra.mxu0 %v59
    %760 = vmatpush.msra.mxu0 %v57
    %761 = vmatpush.msra.mxu0 %v55
    %762 = vmatpush.msra.mxu0 %v53
    %763 = vmatpush.msra.mxu0 %v51
    %764 = vmatmul.f32.gmra.mxu0 %v726
    %v765 = vpop.f32.mrf.mxu0
    %v766 = vadd.f32 0.0, %v765
    %767 = vdwg.mxu0
    %v770 = vrot.slane %v746, 6
    %v771 = vrot.slane %v766, 6
    %v774 = vadd.f32 %v723, %v770
    %v775 = vadd.f32 %v724, %v771
    %v776 = vxor.u32 %v774, 2147483648
    %v777 = vxor.u32 %v775, 2147483648
    %v778 = vmul.f32 %v776, 1.442695
    %v779 = vpow.pop %v778
    %v780 = vmul.f32 %v777, 1.442695
    %v781 = vpow.pop %v780
    %v782 = vadd.f32 %v779, 1.0
    %v783 = vadd.f32 %v781, 1.0
    %v784 = vrcp.pop %v782
    %v785 = vmul.f32 %v782, %v784
    %v786 = vsub.f32 1.0, %v785
    %v787 = vmul.f32 %v784, %v786
    %v788 = vadd.f32 %v784, %v787
    %vm789 = vweird.f32 %v782
    %vm790 = vweird.f32 %v784
    %vm791 = vmor %vm789, %vm790
    %v792 = vsel %vm791, %v784, %v788
    %v793 = vand.u32 2147483647, %v782
    %vm794 = vcmp.eq.f32.partialorder %v793, 8.507059e+37
    %v795 = vand.u32 %v782, 2147483648
    %v796 = vor.u32 1.1754944e-38, %v795
    %v797 = vsel %vm794, %v796, %v792
    %v798 = vmul.f32 1.0, %v797
    %v799 = vrcp.pop %v783
    %v800 = vmul.f32 %v783, %v799
    %v801 = vsub.f32 1.0, %v800
    %v802 = vmul.f32 %v799, %v801
    %v803 = vadd.f32 %v799, %v802
    %vm804 = vweird.f32 %v783
    %vm805 = vweird.f32 %v799
    %vm806 = vmor %vm804, %vm805
    %v807 = vsel %vm806, %v799, %v803
    %v808 = vand.u32 2147483647, %v783
    %vm809 = vcmp.eq.f32.partialorder %v808, 8.507059e+37
    %v810 = vand.u32 %v783, 2147483648
    %v811 = vor.u32 1.1754944e-38, %v810
    %v812 = vsel %vm809, %v811, %v807
    %v813 = vmul.f32 1.0, %v812
    %v814 = vtanh.pop %v775
    %v816 = vrot.slane %v706, 6
    %v818 = vmul.f32 %v798, %v816
    %820 = vrot.lane.b32.xlu0 %v814, 64
    %v821 = vpop.permute.xlu0 %820
    %v823 = vmul.f32 %v798, %v821
    %825 = vrot.lane.b32.xlu0 %v823, 64
    %v826 = vpop.permute.xlu0 %825
    %v828 = vadd.f32 %v818, %v826
    %v829 = vtanh.pop %v828
    %831 = vrot.lane.b32.xlu0 %v829, 64
    %v832 = vpop.permute.xlu0 %831
    %v834 = vmul.f32 %v813, %v832
    %v835 = vrot.slane %v688, 2
    %v837 = vsel %vm540, %v683, %v835
    %v838 = vmul.f32 %v834, %v837
    %v839 = vsub.f32 1.0, %v837
    %v840 = vrot.slane %v696, 6
    %v842 = vmul.f32 %v839, %v840
    %v843 = vadd.f32 %v838, %v842
    %845 = vrot.lane.b32.xlu0 %v837, 64
    %v846 = vpop.permute.xlu0 %845
    %v848 = vmul.f32 %v828, %v846
    %849 = vrot.lane.b32.xlu0 %v816, 64
    %v850 = vpop.permute.xlu0 %849
    %v852 = vmul.f32 %v839, %v850
    %854 = vrot.lane.b32.xlu0 %v852, 64
    %v855 = vpop.permute.xlu0 %854
    %v857 = vadd.f32 %v848, %v855
    %vm858 = vcmask 257026
    %859 = vst.msk [vmem:[#allocation3] sm:$0xc] %vm858, %v838
    %vm860 = vcmask 519426
    %861 = vst.msk [vmem:[#allocation3 + $0xa] sm:$0xc] %vm860, %v838
    %v862 = vrot.slane %v518, 4
    %v863 = vrot.slane %v538, 4
    %v866 = vadd.f32 %v574, %v862
    %v867 = vadd.f32 %v575, %v863
    %v869 = vrot.slane %v843, 2
    %v870 = vsel %vm578, %v869, 0
    %872 = vmatpush.msra.mxu0 0.0
    %873 = vmatpush.msra.mxu0 0.0
    %874 = vmatpush.msra.mxu0 0.0
    %875 = vmatpush.msra.mxu0 0.0
    %876 = vmatpush.msra.mxu0 0.0
    %877 = vmatpush.msra.mxu0 0.0
    %878 = vmatpush.msra.mxu0 0.0
    %879 = vmatpush.msra.mxu0 0.0
    %880 = vmatpush.msra.mxu0 %v64
    %881 = vmatpush.msra.mxu0 %v62
    %882 = vmatpush.msra.mxu0 %v60
    %883 = vmatpush.msra.mxu0 %v58
    %884 = vmatpush.msra.mxu0 %v56
    %885 = vmatpush.msra.mxu0 %v54
    %886 = vmatpush.msra.mxu0 %v52
    %887 = vmatpush.msra.mxu0 %v50
    %888 = vmatmul.f32.gmra.mxu0 %v870
    %v889 = vpop.f32.mrf.mxu0
    %v890 = vadd.f32 0.0, %v889
    %891 = vdwg.mxu0
    %892 = vmatpush.msra.mxu0 0.0
    %893 = vmatpush.msra.mxu0 0.0
    %894 = vmatpush.msra.mxu0 0.0
    %895 = vmatpush.msra.mxu0 0.0
    %896 = vmatpush.msra.mxu0 0.0
    %897 = vmatpush.msra.mxu0 0.0
    %898 = vmatpush.msra.mxu0 0.0
    %899 = vmatpush.msra.mxu0 0.0
    %900 = vmatpush.msra.mxu0 %v65
    %901 = vmatpush.msra.mxu0 %v63
    %902 = vmatpush.msra.mxu0 %v61
    %903 = vmatpush.msra.mxu0 %v59
    %904 = vmatpush.msra.mxu0 %v57
    %905 = vmatpush.msra.mxu0 %v55
    %906 = vmatpush.msra.mxu0 %v53
    %907 = vmatpush.msra.mxu0 %v51
    %908 = vmatmul.f32.gmra.mxu0 %v870
    %v909 = vpop.f32.mrf.mxu0
    %v910 = vadd.f32 0.0, %v909
    %911 = vdwg.mxu0
    %v914 = vrot.slane %v890, 4
    %v915 = vrot.slane %v910, 4
    %v918 = vadd.f32 %v866, %v914
    %v919 = vadd.f32 %v867, %v915
    %v920 = vxor.u32 %v918, 2147483648
    %v921 = vxor.u32 %v919, 2147483648
    %v922 = vmul.f32 %v920, 1.442695
    %v923 = vpow.pop %v922
    %v924 = vmul.f32 %v921, 1.442695
    %v925 = vpow.pop %v924
    %v926 = vadd.f32 %v923, 1.0
    %v927 = vadd.f32 %v925, 1.0
    %v928 = vrcp.pop %v926
    %v929 = vmul.f32 %v926, %v928
    %v930 = vsub.f32 1.0, %v929
    %v931 = vmul.f32 %v928, %v930
    %v932 = vadd.f32 %v928, %v931
    %vm933 = vweird.f32 %v926
    %vm934 = vweird.f32 %v928
    %vm935 = vmor %vm933, %vm934
    %v936 = vsel %vm935, %v928, %v932
    %v937 = vand.u32 2147483647, %v926
    %vm938 = vcmp.eq.f32.partialorder %v937, 8.507059e+37
    %v939 = vand.u32 %v926, 2147483648
    %v940 = vor.u32 1.1754944e-38, %v939
    %v941 = vsel %vm938, %v940, %v936
    %v942 = vmul.f32 1.0, %v941
    %v943 = vrcp.pop %v927
    %v944 = vmul.f32 %v927, %v943
    %v945 = vsub.f32 1.0, %v944
    %v946 = vmul.f32 %v943, %v945
    %v947 = vadd.f32 %v943, %v946
    %vm948 = vweird.f32 %v927
    %vm949 = vweird.f32 %v943
    %vm950 = vmor %vm948, %vm949
    %v951 = vsel %vm950, %v943, %v947
    %v952 = vand.u32 2147483647, %v927
    %vm953 = vcmp.eq.f32.partialorder %v952, 8.507059e+37
    %v954 = vand.u32 %v927, 2147483648
    %v955 = vor.u32 1.1754944e-38, %v954
    %v956 = vsel %vm953, %v955, %v951
    %v957 = vmul.f32 1.0, %v956
    %v958 = vtanh.pop %v919
    %v960 = vrot.slane %v857, 6
    %v962 = vmul.f32 %v942, %v960
    %964 = vrot.lane.b32.xlu0 %v958, 64
    %v965 = vpop.permute.xlu0 %964
    %v967 = vmul.f32 %v942, %v965
    %969 = vrot.lane.b32.xlu0 %v967, 64
    %v970 = vpop.permute.xlu0 %969
    %v972 = vadd.f32 %v962, %v970
    %v973 = vtanh.pop %v972
    %975 = vrot.lane.b32.xlu0 %v973, 64
    %v976 = vpop.permute.xlu0 %975
    %v978 = vmul.f32 %v957, %v976
    %v979 = vmul.f32 %v978, %v692
    %v980 = vrot.slane %v843, 6
    %v982 = vmul.f32 %v694, %v980
    %v983 = vadd.f32 %v979, %v982
    %v984 = vmul.f32 %v972, %v699
    %985 = vrot.lane.b32.xlu0 %v960, 64
    %v986 = vpop.permute.xlu0 %985
    %v988 = vmul.f32 %v694, %v986
    %990 = vrot.lane.b32.xlu0 %v988, 64
    %v991 = vpop.permute.xlu0 %990
    %v993 = vadd.f32 %v984, %v991
    %vm994 = vcmask 259076
    %995 = vst.msk [vmem:[#allocation3] sm:$0x30] %vm994, %v979
    %vm996 = vcmask 521476
    %997 = vst.msk [vmem:[#allocation3 + $0x6] sm:$0x30] %vm996, %v979
    %v998 = vrot.slane %v518, 2
    %v999 = vrot.slane %v538, 2
    %v1002 = vadd.f32 %v715, %v998
    %v1003 = vadd.f32 %v716, %v999
    %v1005 = vrot.slane %v983, 4
    %v1006 = vsel %vm578, %v1005, 0
    %1008 = vmatpush.msra.mxu0 0.0
    %1009 = vmatpush.msra.mxu0 0.0
    %1010 = vmatpush.msra.mxu0 0.0
    %1011 = vmatpush.msra.mxu0 0.0
    %1012 = vmatpush.msra.mxu0 0.0
    %1013 = vmatpush.msra.mxu0 0.0
    %1014 = vmatpush.msra.mxu0 0.0
    %1015 = vmatpush.msra.mxu0 0.0
    %1016 = vmatpush.msra.mxu0 %v64
    %1017 = vmatpush.msra.mxu0 %v62
    %1018 = vmatpush.msra.mxu0 %v60
    %1019 = vmatpush.msra.mxu0 %v58
    %1020 = vmatpush.msra.mxu0 %v56
    %1021 = vmatpush.msra.mxu0 %v54
    %1022 = vmatpush.msra.mxu0 %v52
    %1023 = vmatpush.msra.mxu0 %v50
    %1024 = vmatmul.f32.gmra.mxu0 %v1006
    %v1025 = vpop.f32.mrf.mxu0
    %v1026 = vadd.f32 0.0, %v1025
    %1027 = vdwg.mxu0
    %1028 = vmatpush.msra.mxu0 0.0
    %1029 = vmatpush.msra.mxu0 0.0
    %1030 = vmatpush.msra.mxu0 0.0
    %1031 = vmatpush.msra.mxu0 0.0
    %1032 = vmatpush.msra.mxu0 0.0
    %1033 = vmatpush.msra.mxu0 0.0
    %1034 = vmatpush.msra.mxu0 0.0
    %1035 = vmatpush.msra.mxu0 0.0
    %1036 = vmatpush.msra.mxu0 %v65
    %1037 = vmatpush.msra.mxu0 %v63
    %1038 = vmatpush.msra.mxu0 %v61
    %1039 = vmatpush.msra.mxu0 %v59
    %1040 = vmatpush.msra.mxu0 %v57
    %1041 = vmatpush.msra.mxu0 %v55
    %1042 = vmatpush.msra.mxu0 %v53
    %1043 = vmatpush.msra.mxu0 %v51
    %1044 = vmatmul.f32.gmra.mxu0 %v1006
    %v1045 = vpop.f32.mrf.mxu0
    %v1046 = vadd.f32 0.0, %v1045
    %1047 = vdwg.mxu0
    %v1050 = vrot.slane %v1026, 2
    %v1051 = vrot.slane %v1046, 2
    %v1054 = vadd.f32 %v1002, %v1050
    %v1055 = vadd.f32 %v1003, %v1051
    %v1056 = vxor.u32 %v1054, 2147483648
    %v1057 = vxor.u32 %v1055, 2147483648
    %v1058 = vmul.f32 %v1056, 1.442695
    %v1059 = vpow.pop %v1058
    %v1060 = vmul.f32 %v1057, 1.442695
    %v1061 = vpow.pop %v1060
    %v1062 = vadd.f32 %v1059, 1.0
    %v1063 = vadd.f32 %v1061, 1.0
    %v1064 = vrcp.pop %v1062
    %v1065 = vmul.f32 %v1062, %v1064
    %v1066 = vsub.f32 1.0, %v1065
    %v1067 = vmul.f32 %v1064, %v1066
    %v1068 = vadd.f32 %v1064, %v1067
    %vm1069 = vweird.f32 %v1062
    %vm1070 = vweird.f32 %v1064
    %vm1071 = vmor %vm1069, %vm1070
    %v1072 = vsel %vm1071, %v1064, %v1068
    %v1073 = vand.u32 2147483647, %v1062
    %vm1074 = vcmp.eq.f32.partialorder %v1073, 8.507059e+37
    %v1075 = vand.u32 %v1062, 2147483648
    %v1076 = vor.u32 1.1754944e-38, %v1075
    %v1077 = vsel %vm1074, %v1076, %v1072
    %v1078 = vmul.f32 1.0, %v1077
    %v1079 = vrcp.pop %v1063
    %v1080 = vmul.f32 %v1063, %v1079
    %v1081 = vsub.f32 1.0, %v1080
    %v1082 = vmul.f32 %v1079, %v1081
    %v1083 = vadd.f32 %v1079, %v1082
    %vm1084 = vweird.f32 %v1063
    %vm1085 = vweird.f32 %v1079
    %vm1086 = vmor %vm1084, %vm1085
    %v1087 = vsel %vm1086, %v1079, %v1083
    %v1088 = vand.u32 2147483647, %v1063
    %vm1089 = vcmp.eq.f32.partialorder %v1088, 8.507059e+37
    %v1090 = vand.u32 %v1063, 2147483648
    %v1091 = vor.u32 1.1754944e-38, %v1090
    %v1092 = vsel %vm1089, %v1091, %v1087
    %v1093 = vmul.f32 1.0, %v1092
    %v1094 = vtanh.pop %v1055
    %v1096 = vrot.slane %v993, 6
    %v1098 = vmul.f32 %v1078, %v1096
    %1100 = vrot.lane.b32.xlu0 %v1094, 64
    %v1101 = vpop.permute.xlu0 %1100
    %v1103 = vmul.f32 %v1078, %v1101
    %1105 = vrot.lane.b32.xlu0 %v1103, 64
    %v1106 = vpop.permute.xlu0 %1105
    %v1108 = vadd.f32 %v1098, %v1106
    %v1109 = vtanh.pop %v1108
    %1111 = vrot.lane.b32.xlu0 %v1109, 64
    %v1112 = vpop.permute.xlu0 %1111
    %v1114 = vmul.f32 %v1093, %v1112
    %v1115 = vmul.f32 %v1114, %v837
    %v1116 = vrot.slane %v983, 6
    %v1118 = vmul.f32 %v839, %v1116
    %v1119 = vadd.f32 %v1115, %v1118
    %v1120 = vmul.f32 %v1108, %v846
    %1121 = vrot.lane.b32.xlu0 %v1096, 64
    %v1122 = vpop.permute.xlu0 %1121
    %v1124 = vmul.f32 %v839, %v1122
    %1126 = vrot.lane.b32.xlu0 %v1124, 64
    %v1127 = vpop.permute.xlu0 %1126
    %v1129 = vadd.f32 %v1120, %v1127
    %vm1130 = vcmask 261126
    %1131 = vst.msk [vmem:[#allocation3] sm:$0xc0] %vm1130, %v1115
    %vm1132 = vcmask 523526
    %1133 = vst.msk [vmem:[#allocation3 + $0x2] sm:$0xc0] %vm1132, %v1115
    %v1136 = vrot.slane %v469, 6
    %v1137 = vrot.slane %v492, 6
    %v1140 = vsel %vm566, %v472, %v1136
    %v1141 = vsel %vm567, %v495, %v1137
    %v1142 = vadd.f32 %v1140, %v518
    %v1143 = vadd.f32 %v1141, %v538
    %v1145 = vrot.slane %v1119, 6
    %v1146 = vsel %vm578, %v1145, 0
    %1148 = vmatpush.msra.mxu0 0.0
    %1149 = vmatpush.msra.mxu0 0.0
    %1150 = vmatpush.msra.mxu0 0.0
    %1151 = vmatpush.msra.mxu0 0.0
    %1152 = vmatpush.msra.mxu0 0.0
    %1153 = vmatpush.msra.mxu0 0.0
    %1154 = vmatpush.msra.mxu0 0.0
    %1155 = vmatpush.msra.mxu0 0.0
    %1156 = vmatpush.msra.mxu0 %v64
    %1157 = vmatpush.msra.mxu0 %v62
    %1158 = vmatpush.msra.mxu0 %v60
    %1159 = vmatpush.msra.mxu0 %v58
    %1160 = vmatpush.msra.mxu0 %v56
    %1161 = vmatpush.msra.mxu0 %v54
    %1162 = vmatpush.msra.mxu0 %v52
    %1163 = vmatpush.msra.mxu0 %v50
    %1164 = vmatmul.f32.gmra.mxu0 %v1146
    %v1165 = vpop.f32.mrf.mxu0
    %v1166 = vadd.f32 0.0, %v1165
    %1167 = vdwg.mxu0
    %1168 = vmatpush.msra.mxu0 0.0
    %1169 = vmatpush.msra.mxu0 0.0
    %1170 = vmatpush.msra.mxu0 0.0
    %1171 = vmatpush.msra.mxu0 0.0
    %1172 = vmatpush.msra.mxu0 0.0
    %1173 = vmatpush.msra.mxu0 0.0
    %1174 = vmatpush.msra.mxu0 0.0
    %1175 = vmatpush.msra.mxu0 0.0
    %1176 = vmatpush.msra.mxu0 %v65
    %1177 = vmatpush.msra.mxu0 %v63
    %1178 = vmatpush.msra.mxu0 %v61
    %1179 = vmatpush.msra.mxu0 %v59
    %1180 = vmatpush.msra.mxu0 %v57
    %1181 = vmatpush.msra.mxu0 %v55
    %1182 = vmatpush.msra.mxu0 %v53
    %1183 = vmatpush.msra.mxu0 %v51
    %1184 = vmatmul.f32.gmra.mxu0 %v1146
    %v1185 = vpop.f32.mrf.mxu0
    %v1186 = vadd.f32 0.0, %v1185
    %1187 = vdwg.mxu0
    %v1188 = vadd.f32 %v1142, %v1166
    %v1189 = vadd.f32 %v1143, %v1186
    %v1190 = vxor.u32 %v1188, 2147483648
    %v1191 = vxor.u32 %v1189, 2147483648
    %v1192 = vmul.f32 %v1190, 1.442695
    %v1193 = vpow.pop %v1192
    %v1194 = vmul.f32 %v1191, 1.442695
    %v1195 = vpow.pop %v1194
    %v1196 = vadd.f32 %v1193, 1.0
    %v1197 = vadd.f32 %v1195, 1.0
    %v1198 = vrcp.pop %v1196
    %v1199 = vmul.f32 %v1196, %v1198
    %v1200 = vsub.f32 1.0, %v1199
    %v1201 = vmul.f32 %v1198, %v1200
    %v1202 = vadd.f32 %v1198, %v1201
    %vm1203 = vweird.f32 %v1196
    %vm1204 = vweird.f32 %v1198
    %vm1205 = vmor %vm1203, %vm1204
    %v1206 = vsel %vm1205, %v1198, %v1202
    %v1207 = vand.u32 2147483647, %v1196
    %vm1208 = vcmp.eq.f32.partialorder %v1207, 8.507059e+37
    %v1209 = vand.u32 %v1196, 2147483648
    %v1210 = vor.u32 1.1754944e-38, %v1209
    %v1211 = vsel %vm1208, %v1210, %v1206
    %v1212 = vmul.f32 1.0, %v1211
    %v1213 = vrcp.pop %v1197
    %v1214 = vmul.f32 %v1197, %v1213
    %v1215 = vsub.f32 1.0, %v1214
    %v1216 = vmul.f32 %v1213, %v1215
    %v1217 = vadd.f32 %v1213, %v1216
    %vm1218 = vweird.f32 %v1197
    %vm1219 = vweird.f32 %v1213
    %vm1220 = vmor %vm1218, %vm1219
    %v1221 = vsel %vm1220, %v1213, %v1217
    %v1222 = vand.u32 2147483647, %v1197
    %vm1223 = vcmp.eq.f32.partialorder %v1222, 8.507059e+37
    %v1224 = vand.u32 %v1197, 2147483648
    %v1225 = vor.u32 1.1754944e-38, %v1224
    %v1226 = vsel %vm1223, %v1225, %v1221
    %v1227 = vmul.f32 1.0, %v1226
    %v1228 = vtanh.pop %v1189
    %v1230 = vrot.slane %v1129, 6
    %v1232 = vmul.f32 %v1212, %v1230
    %1234 = vrot.lane.b32.xlu0 %v1228, 64
    %v1235 = vpop.permute.xlu0 %1234
    %v1237 = vmul.f32 %v1212, %v1235
    %1239 = vrot.lane.b32.xlu0 %v1237, 64
    %v1240 = vpop.permute.xlu0 %1239
    %v1242 = vadd.f32 %v1232, %v1240
    %v1243 = vtanh.pop %v1242
    %1245 = vrot.lane.b32.xlu0 %v1243, 64
    %v1246 = vpop.permute.xlu0 %1245
    %v1248 = vmul.f32 %v1227, %v1246
    %v1249 = vrot.slane %v683, 6
    %v1251 = vsel %vm540, %v688, %v1249
    %v1252 = vmul.f32 %v1248, %v1251
    %v1253 = vsub.f32 1.0, %v1251
    %v1255 = vmul.f32 %v1253, %v1145
    %v1256 = vadd.f32 %v1252, %v1255
    %1258 = vrot.lane.b32.xlu0 %v1251, 64
    %v1259 = vpop.permute.xlu0 %1258
    %v1261 = vmul.f32 %v1242, %v1259
    %1262 = vrot.lane.b32.xlu0 %v1230, 64
    %v1263 = vpop.permute.xlu0 %1262
    %v1265 = vmul.f32 %v1253, %v1263
    %1267 = vrot.lane.b32.xlu0 %v1265, 64
    %v1268 = vpop.permute.xlu0 %1267
    %v1270 = vadd.f32 %v1261, %v1268
    %1271 = vst.msk [vmem:[#allocation3 + $0x8] sm:$0x3] %vm707, %v1252
    %1272 = vst.msk [vmem:[#allocation3 + $0x6] sm:$0x3] %vm709, %v1252
    %v1273 = vrot.slane %v469, 2
    %v1274 = vrot.slane %v492, 2
    %v1277 = vsel %vm566, %v472, %v1273
    %v1278 = vsel %vm567, %v495, %v1274
    %v1279 = vadd.f32 %v1277, %v719
    %v1280 = vadd.f32 %v1278, %v720
    %v1282 = vsel %vm578, %v1256, 0
    %1284 = vmatpush.msra.mxu0 0.0
    %1285 = vmatpush.msra.mxu0 0.0
    %1286 = vmatpush.msra.mxu0 0.0
    %1287 = vmatpush.msra.mxu0 0.0
    %1288 = vmatpush.msra.mxu0 0.0
    %1289 = vmatpush.msra.mxu0 0.0
    %1290 = vmatpush.msra.mxu0 0.0
    %1291 = vmatpush.msra.mxu0 0.0
    %1292 = vmatpush.msra.mxu0 %v64
    %1293 = vmatpush.msra.mxu0 %v62
    %1294 = vmatpush.msra.mxu0 %v60
    %1295 = vmatpush.msra.mxu0 %v58
    %1296 = vmatpush.msra.mxu0 %v56
    %1297 = vmatpush.msra.mxu0 %v54
    %1298 = vmatpush.msra.mxu0 %v52
    %1299 = vmatpush.msra.mxu0 %v50
    %1300 = vmatmul.f32.gmra.mxu0 %v1282
    %v1301 = vpop.f32.mrf.mxu0
    %v1302 = vadd.f32 0.0, %v1301
    %1303 = vdwg.mxu0
    %1304 = vmatpush.msra.mxu0 0.0
    %1305 = vmatpush.msra.mxu0 0.0
    %1306 = vmatpush.msra.mxu0 0.0
    %1307 = vmatpush.msra.mxu0 0.0
    %1308 = vmatpush.msra.mxu0 0.0
    %1309 = vmatpush.msra.mxu0 0.0
    %1310 = vmatpush.msra.mxu0 0.0
    %1311 = vmatpush.msra.mxu0 0.0
    %1312 = vmatpush.msra.mxu0 %v65
    %1313 = vmatpush.msra.mxu0 %v63
    %1314 = vmatpush.msra.mxu0 %v61
    %1315 = vmatpush.msra.mxu0 %v59
    %1316 = vmatpush.msra.mxu0 %v57
    %1317 = vmatpush.msra.mxu0 %v55
    %1318 = vmatpush.msra.mxu0 %v53
    %1319 = vmatpush.msra.mxu0 %v51
    %1320 = vmatmul.f32.gmra.mxu0 %v1282
    %v1321 = vpop.f32.mrf.mxu0
    %v1322 = vadd.f32 0.0, %v1321
    %1323 = vdwg.mxu0
    %v1326 = vrot.slane %v1302, 6
    %v1327 = vrot.slane %v1322, 6
    %v1330 = vadd.f32 %v1279, %v1326
    %v1331 = vadd.f32 %v1280, %v1327
    %v1332 = vxor.u32 %v1330, 2147483648
    %v1333 = vxor.u32 %v1331, 2147483648
    %v1334 = vmul.f32 %v1332, 1.442695
    %v1335 = vpow.pop %v1334
    %v1336 = vmul.f32 %v1333, 1.442695
    %v1337 = vpow.pop %v1336
    %v1338 = vadd.f32 %v1335, 1.0
    %v1339 = vadd.f32 %v1337, 1.0
    %v1340 = vrcp.pop %v1338
    %v1341 = vmul.f32 %v1338, %v1340
    %v1342 = vsub.f32 1.0, %v1341
    %v1343 = vmul.f32 %v1340, %v1342
    %v1344 = vadd.f32 %v1340, %v1343
    %vm1345 = vweird.f32 %v1338
    %vm1346 = vweird.f32 %v1340
    %vm1347 = vmor %vm1345, %vm1346
    %v1348 = vsel %vm1347, %v1340, %v1344
    %v1349 = vand.u32 2147483647, %v1338
    %vm1350 = vcmp.eq.f32.partialorder %v1349, 8.507059e+37
    %v1351 = vand.u32 %v1338, 2147483648
    %v1352 = vor.u32 1.1754944e-38, %v1351
    %v1353 = vsel %vm1350, %v1352, %v1348
    %v1354 = vmul.f32 1.0, %v1353
    %v1355 = vrcp.pop %v1339
    %v1356 = vmul.f32 %v1339, %v1355
    %v1357 = vsub.f32 1.0, %v1356
    %v1358 = vmul.f32 %v1355, %v1357
    %v1359 = vadd.f32 %v1355, %v1358
    %vm1360 = vweird.f32 %v1339
    %vm1361 = vweird.f32 %v1355
    %vm1362 = vmor %vm1360, %vm1361
    %v1363 = vsel %vm1362, %v1355, %v1359
    %v1364 = vand.u32 2147483647, %v1339
    %vm1365 = vcmp.eq.f32.partialorder %v1364, 8.507059e+37
    %v1366 = vand.u32 %v1339, 2147483648
    %v1367 = vor.u32 1.1754944e-38, %v1366
    %v1368 = vsel %vm1365, %v1367, %v1363
    %v1369 = vmul.f32 1.0, %v1368
    %v1370 = vtanh.pop %v1331
    %v1372 = vrot.slane %v1270, 6
    %v1374 = vmul.f32 %v1354, %v1372
    %1376 = vrot.lane.b32.xlu0 %v1370, 64
    %v1377 = vpop.permute.xlu0 %1376
    %v1379 = vmul.f32 %v1354, %v1377
    %1381 = vrot.lane.b32.xlu0 %v1379, 64
    %v1382 = vpop.permute.xlu0 %1381
    %v1384 = vadd.f32 %v1374, %v1382
    %v1385 = vtanh.pop %v1384
    %1387 = vrot.lane.b32.xlu0 %v1385, 64
    %v1388 = vpop.permute.xlu0 %1387
    %v1390 = vmul.f32 %v1369, %v1388
    %v1391 = vrot.slane %v683, 2
    %v1393 = vsel %vm540, %v688, %v1391
    %v1394 = vmul.f32 %v1390, %v1393
    %v1395 = vsub.f32 1.0, %v1393
    %v1396 = vrot.slane %v1256, 6
    %v1398 = vmul.f32 %v1395, %v1396
    %v1399 = vadd.f32 %v1394, %v1398
    %1401 = vrot.lane.b32.xlu0 %v1393, 64
    %v1402 = vpop.permute.xlu0 %1401
    %v1404 = vmul.f32 %v1384, %v1402
    %1405 = vrot.lane.b32.xlu0 %v1372, 64
    %v1406 = vpop.permute.xlu0 %1405
    %v1408 = vmul.f32 %v1395, %v1406
    %1410 = vrot.lane.b32.xlu0 %v1408, 64
    %v1411 = vpop.permute.xlu0 %1410
    %v1413 = vadd.f32 %v1404, %v1411
    %1414 = vst.msk [vmem:[#allocation3 + $0x8] sm:$0xc] %vm858, %v1394
    %1415 = vst.msk [vmem:[#allocation3 + $0x2] sm:$0xc] %vm860, %v1394
    %v1416 = vadd.f32 %v1140, %v862
    %v1417 = vadd.f32 %v1141, %v863
    %v1419 = vrot.slane %v1399, 2
    %v1420 = vsel %vm578, %v1419, 0
    %1422 = vmatpush.msra.mxu0 0.0
    %1423 = vmatpush.msra.mxu0 0.0
    %1424 = vmatpush.msra.mxu0 0.0
    %1425 = vmatpush.msra.mxu0 0.0
    %1426 = vmatpush.msra.mxu0 0.0
    %1427 = vmatpush.msra.mxu0 0.0
    %1428 = vmatpush.msra.mxu0 0.0
    %1429 = vmatpush.msra.mxu0 0.0
    %1430 = vmatpush.msra.mxu0 %v64
    %1431 = vmatpush.msra.mxu0 %v62
    %1432 = vmatpush.msra.mxu0 %v60
    %1433 = vmatpush.msra.mxu0 %v58
    %1434 = vmatpush.msra.mxu0 %v56
    %1435 = vmatpush.msra.mxu0 %v54
    %1436 = vmatpush.msra.mxu0 %v52
    %1437 = vmatpush.msra.mxu0 %v50
    %1438 = vmatmul.f32.gmra.mxu0 %v1420
    %v1439 = vpop.f32.mrf.mxu0
    %v1440 = vadd.f32 0.0, %v1439
    %1441 = vdwg.mxu0
    %1442 = vmatpush.msra.mxu0 0.0
    %1443 = vmatpush.msra.mxu0 0.0
    %1444 = vmatpush.msra.mxu0 0.0
    %1445 = vmatpush.msra.mxu0 0.0
    %1446 = vmatpush.msra.mxu0 0.0
    %1447 = vmatpush.msra.mxu0 0.0
    %1448 = vmatpush.msra.mxu0 0.0
    %1449 = vmatpush.msra.mxu0 0.0
    %1450 = vmatpush.msra.mxu0 %v65
    %1451 = vmatpush.msra.mxu0 %v63
    %1452 = vmatpush.msra.mxu0 %v61
    %1453 = vmatpush.msra.mxu0 %v59
    %1454 = vmatpush.msra.mxu0 %v57
    %1455 = vmatpush.msra.mxu0 %v55
    %1456 = vmatpush.msra.mxu0 %v53
    %1457 = vmatpush.msra.mxu0 %v51
    %1458 = vmatmul.f32.gmra.mxu0 %v1420
    %v1459 = vpop.f32.mrf.mxu0
    %v1460 = vadd.f32 0.0, %v1459
    %1461 = vdwg.mxu0
    %v1464 = vrot.slane %v1440, 4
    %v1465 = vrot.slane %v1460, 4
    %v1468 = vadd.f32 %v1416, %v1464
    %v1469 = vadd.f32 %v1417, %v1465
    %v1470 = vxor.u32 %v1468, 2147483648
    %v1471 = vxor.u32 %v1469, 2147483648
    %v1472 = vmul.f32 %v1470, 1.442695
    %v1473 = vpow.pop %v1472
    %v1474 = vmul.f32 %v1471, 1.442695
    %v1475 = vpow.pop %v1474
    %v1476 = vadd.f32 %v1473, 1.0
    %v1477 = vadd.f32 %v1475, 1.0
    %v1478 = vrcp.pop %v1476
    %v1479 = vmul.f32 %v1476, %v1478
    %v1480 = vsub.f32 1.0, %v1479
    %v1481 = vmul.f32 %v1478, %v1480
    %v1482 = vadd.f32 %v1478, %v1481
    %vm1483 = vweird.f32 %v1476
    %vm1484 = vweird.f32 %v1478
    %vm1485 = vmor %vm1483, %vm1484
    %v1486 = vsel %vm1485, %v1478, %v1482
    %v1487 = vand.u32 2147483647, %v1476
    %vm1488 = vcmp.eq.f32.partialorder %v1487, 8.507059e+37
    %v1489 = vand.u32 %v1476, 2147483648
    %v1490 = vor.u32 1.1754944e-38, %v1489
    %v1491 = vsel %vm1488, %v1490, %v1486
    %v1492 = vmul.f32 1.0, %v1491
    %v1493 = vrcp.pop %v1477
    %v1494 = vmul.f32 %v1477, %v1493
    %v1495 = vsub.f32 1.0, %v1494
    %v1496 = vmul.f32 %v1493, %v1495
    %v1497 = vadd.f32 %v1493, %v1496
    %vm1498 = vweird.f32 %v1477
    %vm1499 = vweird.f32 %v1493
    %vm1500 = vmor %vm1498, %vm1499
    %v1501 = vsel %vm1500, %v1493, %v1497
    %v1502 = vand.u32 2147483647, %v1477
    %vm1503 = vcmp.eq.f32.partialorder %v1502, 8.507059e+37
    %v1504 = vand.u32 %v1477, 2147483648
    %v1505 = vor.u32 1.1754944e-38, %v1504
    %v1506 = vsel %vm1503, %v1505, %v1501
    %v1507 = vmul.f32 1.0, %v1506
    %v1508 = vtanh.pop %v1469
    %v1510 = vrot.slane %v1413, 6
    %v1512 = vmul.f32 %v1492, %v1510
    %1514 = vrot.lane.b32.xlu0 %v1508, 64
    %v1515 = vpop.permute.xlu0 %1514
    %v1517 = vmul.f32 %v1492, %v1515
    %1519 = vrot.lane.b32.xlu0 %v1517, 64
    %v1520 = vpop.permute.xlu0 %1519
    %v1522 = vadd.f32 %v1512, %v1520
    %v1523 = vtanh.pop %v1522
    %1525 = vrot.lane.b32.xlu0 %v1523, 64
    %v1526 = vpop.permute.xlu0 %1525
    %v1528 = vmul.f32 %v1507, %v1526
    %v1529 = vmul.f32 %v1528, %v1251
    %v1530 = vrot.slane %v1399, 6
    %v1532 = vmul.f32 %v1253, %v1530
    %v1533 = vadd.f32 %v1529, %v1532
    %v1534 = vmul.f32 %v1522, %v1259
    %1535 = vrot.lane.b32.xlu0 %v1510, 64
    %v1536 = vpop.permute.xlu0 %1535
    %v1538 = vmul.f32 %v1253, %v1536
    %1540 = vrot.lane.b32.xlu0 %v1538, 64
    %v1541 = vpop.permute.xlu0 %1540
    %v1543 = vadd.f32 %v1534, %v1541
    %1544 = vst.msk [vmem:[#allocation3 + $0x8] sm:$0x30] %vm994, %v1529
    %1545 = vst.msk [vmem:[#allocation3 - $0x2] sm:$0x30] %vm996, %v1529
    %v1546 = vadd.f32 %v1277, %v998
    %v1547 = vadd.f32 %v1278, %v999
    %v1549 = vrot.slane %v1533, 4
    %v1550 = vsel %vm578, %v1549, 0
    %1552 = vmatpush.msra.mxu0 0.0
    %1553 = vmatpush.msra.mxu0 0.0
    %1554 = vmatpush.msra.mxu0 0.0
    %1555 = vmatpush.msra.mxu0 0.0
    %1556 = vmatpush.msra.mxu0 0.0
    %1557 = vmatpush.msra.mxu0 0.0
    %1558 = vmatpush.msra.mxu0 0.0
    %1559 = vmatpush.msra.mxu0 0.0
    %1560 = vmatpush.msra.mxu0 %v64
    %1561 = vmatpush.msra.mxu0 %v62
    %1562 = vmatpush.msra.mxu0 %v60
    %1563 = vmatpush.msra.mxu0 %v58
    %1564 = vmatpush.msra.mxu0 %v56
    %1565 = vmatpush.msra.mxu0 %v54
    %1566 = vmatpush.msra.mxu0 %v52
    %1567 = vmatpush.msra.mxu0 %v50
    %1568 = vmatmul.f32.gmra.mxu0 %v1550
    %v1569 = vpop.f32.mrf.mxu0
    %v1570 = vadd.f32 0.0, %v1569
    %1571 = vdwg.mxu0
    %1572 = vmatpush.msra.mxu0 0.0
    %1573 = vmatpush.msra.mxu0 0.0
    %1574 = vmatpush.msra.mxu0 0.0
    %1575 = vmatpush.msra.mxu0 0.0
    %1576 = vmatpush.msra.mxu0 0.0
    %1577 = vmatpush.msra.mxu0 0.0
    %1578 = vmatpush.msra.mxu0 0.0
    %1579 = vmatpush.msra.mxu0 0.0
    %1580 = vmatpush.msra.mxu0 %v65
    %1581 = vmatpush.msra.mxu0 %v63
    %1582 = vmatpush.msra.mxu0 %v61
    %1583 = vmatpush.msra.mxu0 %v59
    %1584 = vmatpush.msra.mxu0 %v57
    %1585 = vmatpush.msra.mxu0 %v55
    %1586 = vmatpush.msra.mxu0 %v53
    %1587 = vmatpush.msra.mxu0 %v51
    %1588 = vmatmul.f32.gmra.mxu0 %v1550
    %v1589 = vpop.f32.mrf.mxu0
    %v1590 = vadd.f32 0.0, %v1589
    %1591 = vdwg.mxu0
    %v1594 = vrot.slane %v1570, 2
    %v1595 = vrot.slane %v1590, 2
    %v1598 = vadd.f32 %v1546, %v1594
    %v1599 = vadd.f32 %v1547, %v1595
    %v1600 = vxor.u32 %v1598, 2147483648
    %v1601 = vxor.u32 %v1599, 2147483648
    %v1602 = vmul.f32 %v1600, 1.442695
    %v1603 = vpow.pop %v1602
    %v1604 = vmul.f32 %v1601, 1.442695
    %v1605 = vpow.pop %v1604
    %v1606 = vadd.f32 %v1603, 1.0
    %v1607 = vadd.f32 %v1605, 1.0
    %v1608 = vrcp.pop %v1606
    %v1609 = vmul.f32 %v1606, %v1608
    %v1610 = vsub.f32 1.0, %v1609
    %v1611 = vmul.f32 %v1608, %v1610
    %v1612 = vadd.f32 %v1608, %v1611
    %vm1613 = vweird.f32 %v1606
    %vm1614 = vweird.f32 %v1608
    %vm1615 = vmor %vm1613, %vm1614
    %v1616 = vsel %vm1615, %v1608, %v1612
    %v1617 = vand.u32 2147483647, %v1606
    %vm1618 = vcmp.eq.f32.partialorder %v1617, 8.507059e+37
    %v1619 = vand.u32 %v1606, 2147483648
    %v1620 = vor.u32 1.1754944e-38, %v1619
    %v1621 = vsel %vm1618, %v1620, %v1616
    %v1622 = vmul.f32 1.0, %v1621
    %v1623 = vrcp.pop %v1607
    %v1624 = vmul.f32 %v1607, %v1623
    %v1625 = vsub.f32 1.0, %v1624
    %v1626 = vmul.f32 %v1623, %v1625
    %v1627 = vadd.f32 %v1623, %v1626
    %vm1628 = vweird.f32 %v1607
    %vm1629 = vweird.f32 %v1623
    %vm1630 = vmor %vm1628, %vm1629
    %v1631 = vsel %vm1630, %v1623, %v1627
    %v1632 = vand.u32 2147483647, %v1607
    %vm1633 = vcmp.eq.f32.partialorder %v1632, 8.507059e+37
    %v1634 = vand.u32 %v1607, 2147483648
    %v1635 = vor.u32 1.1754944e-38, %v1634
    %v1636 = vsel %vm1633, %v1635, %v1631
    %v1637 = vmul.f32 1.0, %v1636
    %v1638 = vtanh.pop %v1599
    %v1640 = vrot.slane %v1543, 6
    %v1642 = vmul.f32 %v1622, %v1640
    %1644 = vrot.lane.b32.xlu0 %v1638, 64
    %v1645 = vpop.permute.xlu0 %1644
    %v1647 = vmul.f32 %v1622, %v1645
    %1649 = vrot.lane.b32.xlu0 %v1647, 64
    %v1650 = vpop.permute.xlu0 %1649
    %v1652 = vadd.f32 %v1642, %v1650
    %v1653 = vtanh.pop %v1652
    %1655 = vrot.lane.b32.xlu0 %v1653, 64
    %v1656 = vpop.permute.xlu0 %1655
    %v1658 = vmul.f32 %v1637, %v1656
    %v1659 = vmul.f32 %v1658, %v1393
    %1660 = vst.msk [vmem:[#allocation3 + $0x8] sm:$0xc0] %vm1130, %v1659
    %1661 = vst.msk [vmem:[#allocation3 - $0x6] sm:$0xc0] %vm1132, %v1659
    %v1662 = vld [vmem:[#allocation3] sm:$0xff]
    %v1663 = vld [vmem:[#allocation3 + $0x8] sm:$0xff]
    %1664 = vmatpush.msra.mxu0 0.0
    %1665 = vmatpush.msra.mxu0 0.0
    %1666 = vmatpush.msra.mxu0 0.0
    %1667 = vmatpush.msra.mxu0 0.0
    %1668 = vmatpush.msra.mxu0 0.0
    %1669 = vmatpush.msra.mxu0 0.0
    %1670 = vmatpush.msra.mxu0 0.0
    %1671 = vmatpush.msra.mxu0 0.0
    %1672 = vmatpush.msra.mxu0 0.0
    %1673 = vmatpush.msra.mxu0 0.0
    %1674 = vmatpush.msra.mxu0 0.0
    %1675 = vmatpush.msra.mxu0 0.0
    %1676 = vmatpush.msra.mxu0 %v79
    %1677 = vmatpush.msra.mxu0 %v78
    %1678 = vmatpush.msra.mxu0 %v77
    %1679 = vmatpush.msra.mxu0 %v76
    %1680 = vmatmul.f32.gmra.mxu0 %v195
    %v1681 = vpop.f32.mrf.mxu0
    %v1682 = vadd.f32 %v98, %v1681
    %1683 = vmatmul.f32.gmra.mxu0 %v198
    %v1684 = vpop.f32.mrf.mxu0
    %v1685 = vadd.f32 %v98, %v1684
    %1686 = vdwg.mxu0
    %v1687 = vtanh.pop %v1682
    %v1688 = vtanh.pop %v1685
    %v1689 = vmul.f32 %v1687, %v683
    %v1690 = vmul.f32 %v1688, %v688
    %v1692 = vsel %vm578, %v1689, 0
    %v1695 = vsel %vm578, %v1690, 0
    %1697 = vmatpush.msra.mxu0 0.0
    %1698 = vmatpush.msra.mxu0 0.0
    %1699 = vmatpush.msra.mxu0 0.0
    %1700 = vmatpush.msra.mxu0 0.0
    %1701 = vmatpush.msra.mxu0 0.0
    %1702 = vmatpush.msra.mxu0 0.0
    %1703 = vmatpush.msra.mxu0 0.0
    %1704 = vmatpush.msra.mxu0 0.0
    %1705 = vmatpush.msra.mxu0 %v95
    %1706 = vmatpush.msra.mxu0 %v94
    %1707 = vmatpush.msra.mxu0 %v93
    %1708 = vmatpush.msra.mxu0 %v92
    %1709 = vmatpush.msra.mxu0 %v91
    %1710 = vmatpush.msra.mxu0 %v90
    %1711 = vmatpush.msra.mxu0 %v89
    %1712 = vmatpush.msra.mxu0 %v88
    %1713 = vmatmul.f32.gmra.mxu0 %v1692
    %v1714 = vpop.f32.mrf.mxu0
    %v1715 = vadd.f32 0.0, %v1714
    %1716 = vmatmul.f32.gmra.mxu0 %v1695
    %v1717 = vpop.f32.mrf.mxu0
    %v1718 = vadd.f32 0.0, %v1717
    %1719 = vdwg.mxu0
    %v1721 = vsel %vm578, %v1662, 0
    %v1724 = vsel %vm578, %v1663, 0
    %1726 = vmatpush.msra.mxu0 0.0
    %1727 = vmatpush.msra.mxu0 0.0
    %1728 = vmatpush.msra.mxu0 0.0
    %1729 = vmatpush.msra.mxu0 0.0
    %1730 = vmatpush.msra.mxu0 0.0
    %1731 = vmatpush.msra.mxu0 0.0
    %1732 = vmatpush.msra.mxu0 0.0
    %1733 = vmatpush.msra.mxu0 0.0
    %1734 = vmatpush.msra.mxu0 %v87
    %1735 = vmatpush.msra.mxu0 %v86
    %1736 = vmatpush.msra.mxu0 %v85
    %1737 = vmatpush.msra.mxu0 %v84
    %1738 = vmatpush.msra.mxu0 %v83
    %1739 = vmatpush.msra.mxu0 %v82
    %1740 = vmatpush.msra.mxu0 %v81
    %1741 = vmatpush.msra.mxu0 %v80
    %1742 = vmatmul.f32.gmra.mxu0 %v1721
    %v1743 = vpop.f32.mrf.mxu0
    %v1744 = vadd.f32 %v1715, %v1743
    %1745 = vmatmul.f32.gmra.mxu0 %v1724
    %v1746 = vpop.f32.mrf.mxu0
    %v1747 = vadd.f32 %v1718, %v1746
    %1748 = vdwg.mxu0
    %v1749 = vadd.f32 %v1744, %v99
    %v1750 = vadd.f32 %v1747, %v99
    %1751 = vst [vmem:[%s3] sm:$0xff] %v1749
    %1752 = vst [vmem:[%s3 + $0x8] sm:$0xff] %v1750
    // Predicated region
    $region18: #{word_sequence_forward.1} parent=1 // pred_check
      _
    $region19: #{word_sequence_forward.1} parent=1 // pred_check_branch
      %1754 = sbr.rel (0) target = $region21
    $region20: #{word_sequence_forward.1} parent=1 // pred_region
      _
    $region21: #{word_sequence_forward.1} parent=1 // pred_fallthru
      _
    // Predicated region
    $region22: #{word_sequence_forward.1} parent=1 // pred_check
      _
    $region23: #{word_sequence_forward.1} parent=1 // pred_check_branch
      %1756 = sbr.rel (0) target = $region25
    $region24: #{word_sequence_forward.1} parent=1 // pred_region
      _
    $region25: #{word_sequence_forward.1} parent=1 // pred_fallthru
      _
    %1757 = vsyncpa [#allocation5], 1

</llo_original>
